<compile_context>
chip_gen: v7x
topology: tpu7x:2x2x1
jax: 0.10.0
libtpu: 0.0.40
codegen_flags: <defaults>
</compile_context>

<pallas_src>
import math

import numpy as np

import jax
import jax.numpy as jnp
from jax import lax
from jax.experimental import pallas as pl
from jax.experimental.pallas import tpu as pltpu


_SQRT_2_OVER_PI = 0.7978845608028654


def _gelu_tanh(z):
    """tanh-approximate GELU (transcendental goes to the EUP slot)."""
    return 0.5 * z * (1.0 + jnp.tanh(_SQRT_2_OVER_PI * (z + 0.044715 * z * z * z)))


def _round_up(v, m):
    return ((v + m - 1) // m) * m


def _fourier_block_kernel(x_ref, dfwd_ref, dinv_ref, wsp_ref, wc_ref, b_ref, o_ref):
    """One grid step = both (SpectralConv1d + 1x1 Conv1d + GELU) stages of B samples.

    Refs per grid step:
      x_ref    : VMEM (B, C, L)  f32          padded input block (C, L already padded)
      dfwd_ref : VMEM (L, 2M)    bf16         fused forward truncated-DFT [cos | -sin]
      dinv_ref : VMEM (2M, L)    bf16         fused inverse truncated-DFT (irfft scaling folded in)
      wsp_ref  : VMEM (2*S, Cin, Cout, M) bf16  spectral weights [s0_re, s0_im, s1_re, s1_im]
      wc_ref   : VMEM (S, Cout, Cin) bf16     1x1 conv weights (all stages, resident)
      b_ref    : VMEM (S, Cout, 1)  f32       1x1 conv biases
      o_ref    : VMEM (B, C, L)               output block
    """
    B, C, L = x_ref.shape
    M2 = dfwd_ref.shape[1]
    M = M2 // 2
    n_stages = wc_ref.shape[0]

    # Running activation as a live value (no scratch round-trip between stages).
    cur = x_ref[...].reshape(B * C, L).astype(jnp.bfloat16)          # (B*C, L) bf16

    out = None
    for s in range(n_stages):                                         # static unroll (2 stages)
        # ---- SpectralConv1d: fused truncated rfft, one (B*C,L)@(L,2M) matmul ----
        f = jnp.dot(cur, dfwd_ref[...],
                    preferred_element_type=jnp.float32)               # (B*C, 2M) = [Re | Im]
        f = f.reshape(B, C, M2)
        fre = f[:, :, :M]                                             # (B, Cin, M) f32
        fim = f[:, :, M:]

        # per-mode complex channel mixing (VPU, f32; products in f32 so the same
        # code is exact on v5e which has no bf16 VALU):
        #   g[o,m] = sum_i F[i,m] * W[i,o,m]      (complex)
        wre = wsp_ref[2 * s].astype(jnp.float32)                      # (Cin, Cout, M)
        wim = wsp_ref[2 * s + 1].astype(jnp.float32)
        fre_b = fre[:, :, None, :]                                    # (B, Cin, 1, M)
        fim_b = fim[:, :, None, :]
        gre = jnp.sum(fre_b * wre - fim_b * wim, axis=1)              # (B, Cout, M)
        gim = jnp.sum(fre_b * wim + fim_b * wre, axis=1)              # (B, Cout, M)

        # fused truncated irfft: one (B*C,2M)@(2M,L) matmul (the '+' of the re/im
        # branches is absorbed into the contraction; 1/L & x2 scaling folded in dinv)
        g = jnp.concatenate([gre, gim], axis=-1)                      # (B, Cout, 2M) f32
        g = g.reshape(B * C, M2).astype(jnp.bfloat16)
        y1 = jnp.dot(g, dinv_ref[...],
                     preferred_element_type=jnp.float32)              # (B*C, L)
        y1 = y1.reshape(B, C, L)

        # ---- Conv1d(kernel_size=1): batched (Cout,Cin)@(Cin,L) MXU matmul + bias ----
        wcb = jnp.broadcast_to(wc_ref[s][None], (B, C, C))            # (B, Cout, Cin) bf16
        y2 = lax.dot_general(
            wcb, cur.reshape(B, C, L),
            dimension_numbers=(((2,), (1,)), ((0,), (0,))),
            preferred_element_type=jnp.float32)                       # (B, Cout, L)

        # ---- GELU (tanh approx -> EUP), f32 ----
        out = _gelu_tanh(y1 + y2 + b_ref[s][None])                    # (B, C, L)

        if s + 1 < n_stages:                                          # no dead write at last stage
            cur = out.reshape(B * C, L).astype(jnp.bfloat16)

    o_ref[...] = out.astype(o_ref.dtype)


def fourier_basic_block_1d(x_ncl, w_re, w_im, conv_w, conv_b, *, block_batch=None):
    """Pallas implementation of FourierBasicBlock1D.forward (norm=False, gelu).

    x_ncl   : (N, C, L)          PyTorch NCL layout
    w_re    : (2, C, C, M)       SpectralConv1d weight real part, (in, out, modes) per stage
    w_im    : (2, C, C, M)       SpectralConv1d weight imag part
    conv_w  : (2, C, C)          Conv1d(k=1) weight (out, in) per stage
    conv_b  : (2, C)             Conv1d(k=1) bias per stage
    """
    N, C, L = x_ncl.shape
    n_stages = 2
    M = w_re.shape[-1]
    assert w_re.shape == (n_stages, C, C, M) and w_im.shape == w_re.shape
    assert conv_w.shape == (n_stages, C, C) and conv_b.shape == (n_stages, C)
    assert M <= L // 2 + 1, "modes must be <= L//2 + 1"
    # TODO(synk): in_planes != planes would need per-stage (Cin, Cout) weight shapes;
    # this kernel assumes Cin == Cout == C (as required by the stacked weights).

    # ---- padding for lane-dense stores (L -> mult of 128) and aligned sublanes (C -> mult of 8)
    C_p = _round_up(C, 8)
    L_p = _round_up(L, 128)
    pad_c, pad_l = C_p - C, L_p - L

    # ---- batch blocking: B samples per grid step; keep >= 2 grid steps when possible (v7x 2 TCs)
    if block_batch is None:
        cands = [d for d in range(1, min(N, 8) + 1) if N % d == 0]
        pref = [d for d in cands if N // d >= 2]
        block_batch = max(pref) if pref else max(cands)
    B = block_batch
    assert N % B == 0, "block_batch must divide N"

    # ---- fused truncated-DFT matrices (host-side constants, bf16 MXU operands) ----
    ll = np.arange(L)[:, None]
    mm = np.arange(M)[None, :]
    ang_f = 2.0 * np.pi * ll * mm / L                        # (L, M)
    dfwd_np = np.concatenate([np.cos(ang_f), -np.sin(ang_f)], axis=1)      # (L, 2M)
    # irfft with only bins [0, M) nonzero:
    #   x[l] = sum_m scale_m * (Re F_m cos(2*pi*m*l/L) - Im F_m sin(2*pi*m*l/L))
    scale = np.full((M,), 2.0 / L)
    scale[0] = 1.0 / L
    if L % 2 == 0 and M == L // 2 + 1:                       # Nyquist bin, if present
        scale[-1] = 1.0 / L
    ang_i = 2.0 * np.pi * np.arange(M)[:, None] * np.arange(L)[None, :] / L  # (M, L)
    dinv_np = np.concatenate([scale[:, None] * np.cos(ang_i),
                              -scale[:, None] * np.sin(ang_i)], axis=0)      # (2M, L)
    # zero-pad: padded L region contributes nothing to the modes and stays out of the real output
    dfwd_p = np.zeros((L_p, 2 * M), np.float32); dfwd_p[:L, :] = dfwd_np
    dinv_p = np.zeros((2 * M, L_p), np.float32); dinv_p[:, :L] = dinv_np
    dfwd = jnp.asarray(dfwd_p, dtype=jnp.bfloat16)
    dinv = jnp.asarray(dinv_p, dtype=jnp.bfloat16)

    # ---- pack per-stage params (single resident block each, constant index_map) ----
    wsp = jnp.stack([w_re, w_im], axis=1)                               # (S, 2, Cin, Cout, M)
    wsp = jnp.pad(wsp, ((0, 0), (0, 0), (0, pad_c), (0, pad_c), (0, 0)))
    wsp = wsp.reshape(n_stages * 2, C_p, C_p, M).astype(jnp.bfloat16)   # [s0_re,s0_im,s1_re,s1_im]
    wc = jnp.pad(conv_w, ((0, 0), (0, pad_c), (0, pad_c))).astype(jnp.bfloat16)   # (S, Cout, Cin)
    bias = jnp.pad(conv_b, ((0, 0), (0, pad_c)))[:, :, None].astype(jnp.float32)  # (S, Cout, 1)

    x_p = jnp.pad(x_ncl, ((0, 0), (0, pad_c), (0, pad_l)))              # (N, C_p, L_p)

    out = pl.pallas_call(
        _fourier_block_kernel,
        out_shape=jax.ShapeDtypeStruct((N, C_p, L_p), x_ncl.dtype),
        grid_spec=pltpu.PrefetchScalarGridSpec(
            num_scalar_prefetch=0,
            grid=(N // B,),                                  # single parallel batch-block axis
            in_specs=[
                pl.BlockSpec((B, C_p, L_p), lambda i: (i, 0, 0)),            # x block
                pl.BlockSpec((L_p, 2 * M), lambda i: (0, 0)),                # fwd DFT (resident)
                pl.BlockSpec((2 * M, L_p), lambda i: (0, 0)),                # inv DFT (resident)
                pl.BlockSpec((2 * n_stages, C_p, C_p, M),
                             lambda i: (0, 0, 0, 0)),                        # spectral w (resident)
                pl.BlockSpec((n_stages, C_p, C_p), lambda i: (0, 0, 0)),     # conv w (resident)
                pl.BlockSpec((n_stages, C_p, 1), lambda i: (0, 0, 0)),       # conv bias (resident)
            ],
            out_specs=pl.BlockSpec((B, C_p, L_p), lambda i: (i, 0, 0)),
        ),
        compiler_params=pltpu.CompilerParams(
            dimension_semantics=("parallel",),
            vmem_limit_bytes=64 * 1024 * 1024,
        ),
    )(x_p, dfwd, dinv, wsp, wc, bias)

    return out[:, :C, :L]


# ----------------------------- pure-JAX reference -----------------------------
def _spectral_conv_ref(x, wre, wim, modes):
    """SpectralConv1d: rfft -> complex mixing of first `modes` bins -> irfft."""
    x_ft = jnp.fft.rfft(x, axis=-1)                                   # (N, Cin, L//2+1)
    w = wre.astype(jnp.complex64) + 1j * wim.astype(jnp.complex64)    # (Cin, Cout, M)
    mixed = jnp.einsum("bix,iox->box", x_ft[:, :, :modes], w)
    out_ft = jnp.zeros((x.shape[0], wre.shape[1], x.shape[-1] // 2 + 1),
                       dtype=jnp.complex64)
    out_ft = out_ft.at[:, :, :modes].set(mixed)
    return jnp.fft.irfft(out_ft, n=x.shape[-1], axis=-1)


def reference_forward(x, w_re, w_im, conv_w, conv_b, modes):
    out = x
    for s in range(2):
        x1 = _spectral_conv_ref(out, w_re[s], w_im[s], modes)
        x2 = jnp.einsum("oi,bil->bol", conv_w[s], out) + conv_b[s][None, :, None]
        out = jax.nn.gelu(x1 + x2, approximate=False)
    return out


if __name__ == "__main__":
    # Small shapes consistent with the module (in_planes == planes, modes <= L//2).
    N, C, L, M = 2, 8, 32, 8

    key = jax.random.PRNGKey(0)
    k0, k1, k2, k3, k4 = jax.random.split(key, 5)
    # Spectral weights scaled so the spectral branch contributes O(1) to the output
    # (PyTorch's 1/(Cin*Cout) init would make it numerically negligible at these sizes).
    w_re = 0.3 * jax.random.normal(k0, (2, C, C, M), jnp.float32)
    w_im = 0.3 * jax.random.normal(k1, (2, C, C, M), jnp.float32)
    bound = 1.0 / math.sqrt(C)    # PyTorch Conv1d(k=1) default init bound
    conv_w = jax.random.uniform(k2, (2, C, C), jnp.float32, -bound, bound)
    conv_b = jax.random.uniform(k3, (2, C), jnp.float32, -bound, bound)
    x = jax.random.normal(k4, (N, C, L), jnp.float32)

    out = jax.block_until_ready(
        fourier_basic_block_1d(x, w_re, w_im, conv_w, conv_b))
    ref = jax.block_until_ready(
        reference_forward(x, w_re, w_im, conv_w, conv_b, M))

    assert out.shape == (N, C, L) and out.dtype == x.dtype
    # Kernel uses single-pass bf16 MXU operands and tanh-approximate GELU while the
    # reference is full f32 FFT math + exact GELU, so expected deviation is ~1e-2
    # worst case; 5e-2 still catches any structural / scaling / sign bug (those are O(1)).
    if not jnp.allclose(out, ref, rtol=5e-2, atol=5e-2):
        max_err = float(jnp.max(jnp.abs(out - ref)))
        raise AssertionError(f"mismatch vs reference, max abs err = {max_err}")

    print("KERNEL_OK")
</pallas_src>

<mosaic_0001>
module attributes {stable_mosaic.version = 11 : i64} {
  func.func @_fourier_block_kernel(%arg0: i32, %arg1: memref<1x8x128xf32, #tpu.memory_space<vmem>>, %arg2: memref<128x16xbf16, #tpu.memory_space<vmem>>, %arg3: memref<16x128xbf16, #tpu.memory_space<vmem>>, %arg4: memref<4x8x8x8xbf16, #tpu.memory_space<vmem>>, %arg5: memref<2x8x8xbf16, #tpu.memory_space<vmem>>, %arg6: memref<2x8x1xf32, #tpu.memory_space<vmem>>, %arg7: memref<1x8x128xf32, #tpu.memory_space<vmem>>) attributes {dimension_semantics = [#tpu.dimension_semantics<parallel>], iteration_bounds = array<i64: 2>, scalar_prefetch = 0 : i64, scratch_operands = 0 : i64, tpu.core_type = #tpu.core_type<tc>, window_params = [{transform_indices = @transform_0, window_bounds = array<i64: 1, 8, 128>}, {pipeline_mode = #tpu.pipeline_mode<synchronous>, transform_indices = @transform_1, window_bounds = array<i64: 128, 16>}, {pipeline_mode = #tpu.pipeline_mode<synchronous>, transform_indices = @transform_2, window_bounds = array<i64: 16, 128>}, {pipeline_mode = #tpu.pipeline_mode<synchronous>, transform_indices = @transform_3, window_bounds = array<i64: 4, 8, 8, 8>}, {pipeline_mode = #tpu.pipeline_mode<synchronous>, transform_indices = @transform_4, window_bounds = array<i64: 2, 8, 8>}, {pipeline_mode = #tpu.pipeline_mode<synchronous>, transform_indices = @transform_5, window_bounds = array<i64: 2, 8, 1>}, {transform_indices = @transform_6, window_bounds = array<i64: 1, 8, 128>}]} {
    %c0 = arith.constant 0 : index
    %c0_0 = arith.constant 0 : index
    %c0_1 = arith.constant 0 : index
    %0 = vector.load %arg1[%c0, %c0_0, %c0_1] : memref<1x8x128xf32, #tpu.memory_space<vmem>>, vector<1x8x128xf32>
    %1 = vector.shape_cast %0 : vector<1x8x128xf32> to vector<8x128xf32>
    %2 = arith.truncf %1 : vector<8x128xf32> to vector<8x128xbf16>
    %c0_2 = arith.constant 0 : index
    %c0_3 = arith.constant 0 : index
    %3 = vector.load %arg2[%c0_2, %c0_3] : memref<128x16xbf16, #tpu.memory_space<vmem>>, vector<128x16xbf16>
    %cst = arith.constant dense<0.000000e+00> : vector<8x16xf32>
    %4 = tpu.matmul %2, %3, %cst {dimension_numbers = #tpu.dot_dimension_numbers<[1], [0], [0], [1], [0, 0, 1, 1], [], []>} : vector<8x128xbf16>, vector<128x16xbf16>, vector<8x16xf32> -> vector<8x16xf32>
    %5 = vector.shape_cast %4 : vector<8x16xf32> to vector<1x8x16xf32>
    %6 = vector.extract_strided_slice %5 {offsets = [0, 0, 0], sizes = [1, 8, 8], strides = [1, 1, 1]} : vector<1x8x16xf32> to vector<1x8x8xf32>
    %7 = vector.extract_strided_slice %5 {offsets = [0, 0, 8], sizes = [1, 8, 8], strides = [1, 1, 1]} : vector<1x8x16xf32> to vector<1x8x8xf32>
    %c0_4 = arith.constant 0 : index
    %c0_5 = arith.constant 0 : index
    %c0_6 = arith.constant 0 : index
    %c0_7 = arith.constant 0 : index
    %8 = vector.load %arg4[%c0_4, %c0_5, %c0_6, %c0_7] : memref<4x8x8x8xbf16, #tpu.memory_space<vmem>>, vector<1x8x8x8xbf16>
    %9 = vector.shape_cast %8 : vector<1x8x8x8xbf16> to vector<8x8x8xbf16>
    %10 = arith.extf %9 : vector<8x8x8xbf16> to vector<8x8x8xf32>
    %c1 = arith.constant 1 : index
    %c0_8 = arith.constant 0 : index
    %c0_9 = arith.constant 0 : index
    %c0_10 = arith.constant 0 : index
    %11 = vector.load %arg4[%c1, %c0_8, %c0_9, %c0_10] : memref<4x8x8x8xbf16, #tpu.memory_space<vmem>>, vector<1x8x8x8xbf16>
    %12 = vector.shape_cast %11 : vector<1x8x8x8xbf16> to vector<8x8x8xbf16>
    %13 = arith.extf %12 : vector<8x8x8xbf16> to vector<8x8x8xf32>
    %14 = vector.shape_cast %6 : vector<1x8x8xf32> to vector<1x8x1x8xf32>
    %15 = vector.shape_cast %7 : vector<1x8x8xf32> to vector<1x8x1x8xf32>
    %16 = vector.shape_cast %10 : vector<8x8x8xf32> to vector<1x8x8x8xf32>
    %17 = vector.broadcast %14 : vector<1x8x1x8xf32> to vector<1x8x8x8xf32>
    %18 = arith.mulf %17, %16 : vector<1x8x8x8xf32>
    %19 = vector.shape_cast %13 : vector<8x8x8xf32> to vector<1x8x8x8xf32>
    %20 = vector.broadcast %15 : vector<1x8x1x8xf32> to vector<1x8x8x8xf32>
    %21 = arith.mulf %20, %19 : vector<1x8x8x8xf32>
    %22 = arith.subf %18, %21 : vector<1x8x8x8xf32>
    %cst_11 = arith.constant dense<0.000000e+00> : vector<1x8x8xf32>
    %23 = vector.multi_reduction <add>, %22, %cst_11 [1] : vector<1x8x8x8xf32> to vector<1x8x8xf32>
    %24 = vector.shape_cast %13 : vector<8x8x8xf32> to vector<1x8x8x8xf32>
    %25 = vector.broadcast %14 : vector<1x8x1x8xf32> to vector<1x8x8x8xf32>
    %26 = arith.mulf %25, %24 : vector<1x8x8x8xf32>
    %27 = vector.shape_cast %10 : vector<8x8x8xf32> to vector<1x8x8x8xf32>
    %28 = vector.broadcast %15 : vector<1x8x1x8xf32> to vector<1x8x8x8xf32>
    %29 = arith.mulf %28, %27 : vector<1x8x8x8xf32>
    %30 = arith.addf %26, %29 : vector<1x8x8x8xf32>
    %cst_12 = arith.constant dense<0.000000e+00> : vector<1x8x8xf32>
    %31 = vector.multi_reduction <add>, %30, %cst_12 [1] : vector<1x8x8x8xf32> to vector<1x8x8xf32>
    %32 = tpu.concatenate %23, %31 in 2 : vector<1x8x8xf32>, vector<1x8x8xf32> -> vector<1x8x16xf32>
    %33 = vector.shape_cast %32 : vector<1x8x16xf32> to vector<8x16xf32>
    %34 = arith.truncf %33 : vector<8x16xf32> to vector<8x16xbf16>
    %c0_13 = arith.constant 0 : index
    %c0_14 = arith.constant 0 : index
    %35 = vector.load %arg3[%c0_13, %c0_14] : memref<16x128xbf16, #tpu.memory_space<vmem>>, vector<16x128xbf16>
    %cst_15 = arith.constant dense<0.000000e+00> : vector<8x128xf32>
    %36 = tpu.matmul %34, %35, %cst_15 {dimension_numbers = #tpu.dot_dimension_numbers<[1], [0], [0], [1], [0, 0, 1, 1], [], []>} : vector<8x16xbf16>, vector<16x128xbf16>, vector<8x128xf32> -> vector<8x128xf32>
    %37 = vector.shape_cast %36 : vector<8x128xf32> to vector<1x8x128xf32>
    %c0_16 = arith.constant 0 : index
    %c0_17 = arith.constant 0 : index
    %c0_18 = arith.constant 0 : index
    %38 = vector.load %arg5[%c0_16, %c0_17, %c0_18] : memref<2x8x8xbf16, #tpu.memory_space<vmem>>, vector<1x8x8xbf16>
    %39 = vector.shape_cast %38 : vector<1x8x8xbf16> to vector<8x8xbf16>
    %40 = vector.shape_cast %39 : vector<8x8xbf16> to vector<1x8x8xbf16>
    %41 = vector.shape_cast %2 : vector<8x128xbf16> to vector<1x8x128xbf16>
    %cst_19 = arith.constant dense<0.000000e+00> : vector<1x8x128xf32>
    %42 = tpu.matmul %40, %41, %cst_19 {dimension_numbers = #tpu.dot_dimension_numbers<[2], [1], [1], [2], [0, 0, 0, 1, 1, 2], [0], [0]>} : vector<1x8x8xbf16>, vector<1x8x128xbf16>, vector<1x8x128xf32> -> vector<1x8x128xf32>
    %43 = arith.addf %37, %42 : vector<1x8x128xf32>
    %c0_20 = arith.constant 0 : index
    %c0_21 = arith.constant 0 : index
    %c0_22 = arith.constant 0 : index
    %44 = vector.load %arg6[%c0_20, %c0_21, %c0_22] : memref<2x8x1xf32, #tpu.memory_space<vmem>>, vector<1x8x1xf32>
    %45 = vector.shape_cast %44 : vector<1x8x1xf32> to vector<8x1xf32>
    %46 = vector.shape_cast %45 : vector<8x1xf32> to vector<1x8x1xf32>
    %47 = vector.broadcast %46 : vector<1x8x1xf32> to vector<1x8x128xf32>
    %48 = arith.addf %43, %47 : vector<1x8x128xf32>
    %cst_23 = arith.constant 5.000000e-01 : f32
    %49 = vector.broadcast %cst_23 : f32 to vector<1x8x128xf32>
    %50 = arith.mulf %49, %48 : vector<1x8x128xf32>
    %cst_24 = arith.constant 4.471500e-02 : f32
    %51 = vector.broadcast %cst_24 : f32 to vector<1x8x128xf32>
    %52 = arith.mulf %51, %48 : vector<1x8x128xf32>
    %53 = arith.mulf %52, %48 : vector<1x8x128xf32>
    %54 = arith.mulf %53, %48 : vector<1x8x128xf32>
    %55 = arith.addf %48, %54 : vector<1x8x128xf32>
    %cst_25 = arith.constant 0.797884583 : f32
    %56 = vector.broadcast %cst_25 : f32 to vector<1x8x128xf32>
    %57 = arith.mulf %56, %55 : vector<1x8x128xf32>
    %58 = math.tanh %57 : vector<1x8x128xf32>
    %cst_26 = arith.constant 1.000000e+00 : f32
    %59 = vector.broadcast %cst_26 : f32 to vector<1x8x128xf32>
    %60 = arith.addf %59, %58 : vector<1x8x128xf32>
    %61 = arith.mulf %50, %60 : vector<1x8x128xf32>
    %62 = vector.shape_cast %61 : vector<1x8x128xf32> to vector<8x128xf32>
    %63 = arith.truncf %62 : vector<8x128xf32> to vector<8x128xbf16>
    %c0_27 = arith.constant 0 : index
    %c0_28 = arith.constant 0 : index
    %64 = vector.load %arg2[%c0_27, %c0_28] : memref<128x16xbf16, #tpu.memory_space<vmem>>, vector<128x16xbf16>
    %cst_29 = arith.constant dense<0.000000e+00> : vector<8x16xf32>
    %65 = tpu.matmul %63, %64, %cst_29 {dimension_numbers = #tpu.dot_dimension_numbers<[1], [0], [0], [1], [0, 0, 1, 1], [], []>} : vector<8x128xbf16>, vector<128x16xbf16>, vector<8x16xf32> -> vector<8x16xf32>
    %66 = vector.shape_cast %65 : vector<8x16xf32> to vector<1x8x16xf32>
    %67 = vector.extract_strided_slice %66 {offsets = [0, 0, 0], sizes = [1, 8, 8], strides = [1, 1, 1]} : vector<1x8x16xf32> to vector<1x8x8xf32>
    %68 = vector.extract_strided_slice %66 {offsets = [0, 0, 8], sizes = [1, 8, 8], strides = [1, 1, 1]} : vector<1x8x16xf32> to vector<1x8x8xf32>
    %c2 = arith.constant 2 : index
    %c0_30 = arith.constant 0 : index
    %c0_31 = arith.constant 0 : index
    %c0_32 = arith.constant 0 : index
    %69 = vector.load %arg4[%c2, %c0_30, %c0_31, %c0_32] : memref<4x8x8x8xbf16, #tpu.memory_space<vmem>>, vector<1x8x8x8xbf16>
    %70 = vector.shape_cast %69 : vector<1x8x8x8xbf16> to vector<8x8x8xbf16>
    %71 = arith.extf %70 : vector<8x8x8xbf16> to vector<8x8x8xf32>
    %c3 = arith.constant 3 : index
    %c0_33 = arith.constant 0 : index
    %c0_34 = arith.constant 0 : index
    %c0_35 = arith.constant 0 : index
    %72 = vector.load %arg4[%c3, %c0_33, %c0_34, %c0_35] : memref<4x8x8x8xbf16, #tpu.memory_space<vmem>>, vector<1x8x8x8xbf16>
    %73 = vector.shape_cast %72 : vector<1x8x8x8xbf16> to vector<8x8x8xbf16>
    %74 = arith.extf %73 : vector<8x8x8xbf16> to vector<8x8x8xf32>
    %75 = vector.shape_cast %67 : vector<1x8x8xf32> to vector<1x8x1x8xf32>
    %76 = vector.shape_cast %68 : vector<1x8x8xf32> to vector<1x8x1x8xf32>
    %77 = vector.shape_cast %71 : vector<8x8x8xf32> to vector<1x8x8x8xf32>
    %78 = vector.broadcast %75 : vector<1x8x1x8xf32> to vector<1x8x8x8xf32>
    %79 = arith.mulf %78, %77 : vector<1x8x8x8xf32>
    %80 = vector.shape_cast %74 : vector<8x8x8xf32> to vector<1x8x8x8xf32>
    %81 = vector.broadcast %76 : vector<1x8x1x8xf32> to vector<1x8x8x8xf32>
    %82 = arith.mulf %81, %80 : vector<1x8x8x8xf32>
    %83 = arith.subf %79, %82 : vector<1x8x8x8xf32>
    %cst_36 = arith.constant dense<0.000000e+00> : vector<1x8x8xf32>
    %84 = vector.multi_reduction <add>, %83, %cst_36 [1] : vector<1x8x8x8xf32> to vector<1x8x8xf32>
    %85 = vector.shape_cast %74 : vector<8x8x8xf32> to vector<1x8x8x8xf32>
    %86 = vector.broadcast %75 : vector<1x8x1x8xf32> to vector<1x8x8x8xf32>
    %87 = arith.mulf %86, %85 : vector<1x8x8x8xf32>
    %88 = vector.shape_cast %71 : vector<8x8x8xf32> to vector<1x8x8x8xf32>
    %89 = vector.broadcast %76 : vector<1x8x1x8xf32> to vector<1x8x8x8xf32>
    %90 = arith.mulf %89, %88 : vector<1x8x8x8xf32>
    %91 = arith.addf %87, %90 : vector<1x8x8x8xf32>
    %cst_37 = arith.constant dense<0.000000e+00> : vector<1x8x8xf32>
    %92 = vector.multi_reduction <add>, %91, %cst_37 [1] : vector<1x8x8x8xf32> to vector<1x8x8xf32>
    %93 = tpu.concatenate %84, %92 in 2 : vector<1x8x8xf32>, vector<1x8x8xf32> -> vector<1x8x16xf32>
    %94 = vector.shape_cast %93 : vector<1x8x16xf32> to vector<8x16xf32>
    %95 = arith.truncf %94 : vector<8x16xf32> to vector<8x16xbf16>
    %c0_38 = arith.constant 0 : index
    %c0_39 = arith.constant 0 : index
    %96 = vector.load %arg3[%c0_38, %c0_39] : memref<16x128xbf16, #tpu.memory_space<vmem>>, vector<16x128xbf16>
    %cst_40 = arith.constant dense<0.000000e+00> : vector<8x128xf32>
    %97 = tpu.matmul %95, %96, %cst_40 {dimension_numbers = #tpu.dot_dimension_numbers<[1], [0], [0], [1], [0, 0, 1, 1], [], []>} : vector<8x16xbf16>, vector<16x128xbf16>, vector<8x128xf32> -> vector<8x128xf32>
    %98 = vector.shape_cast %97 : vector<8x128xf32> to vector<1x8x128xf32>
    %c1_41 = arith.constant 1 : index
    %c0_42 = arith.constant 0 : index
    %c0_43 = arith.constant 0 : index
    %99 = vector.load %arg5[%c1_41, %c0_42, %c0_43] : memref<2x8x8xbf16, #tpu.memory_space<vmem>>, vector<1x8x8xbf16>
    %100 = vector.shape_cast %99 : vector<1x8x8xbf16> to vector<8x8xbf16>
    %101 = vector.shape_cast %100 : vector<8x8xbf16> to vector<1x8x8xbf16>
    %102 = vector.shape_cast %63 : vector<8x128xbf16> to vector<1x8x128xbf16>
    %cst_44 = arith.constant dense<0.000000e+00> : vector<1x8x128xf32>
    %103 = tpu.matmul %101, %102, %cst_44 {dimension_numbers = #tpu.dot_dimension_numbers<[2], [1], [1], [2], [0, 0, 0, 1, 1, 2], [0], [0]>} : vector<1x8x8xbf16>, vector<1x8x128xbf16>, vector<1x8x128xf32> -> vector<1x8x128xf32>
    %104 = arith.addf %98, %103 : vector<1x8x128xf32>
    %c1_45 = arith.constant 1 : index
    %c0_46 = arith.constant 0 : index
    %c0_47 = arith.constant 0 : index
    %105 = vector.load %arg6[%c1_45, %c0_46, %c0_47] : memref<2x8x1xf32, #tpu.memory_space<vmem>>, vector<1x8x1xf32>
    %106 = vector.shape_cast %105 : vector<1x8x1xf32> to vector<8x1xf32>
    %107 = vector.shape_cast %106 : vector<8x1xf32> to vector<1x8x1xf32>
    %108 = vector.broadcast %107 : vector<1x8x1xf32> to vector<1x8x128xf32>
    %109 = arith.addf %104, %108 : vector<1x8x128xf32>
    %cst_48 = arith.constant 5.000000e-01 : f32
    %110 = vector.broadcast %cst_48 : f32 to vector<1x8x128xf32>
    %111 = arith.mulf %110, %109 : vector<1x8x128xf32>
    %cst_49 = arith.constant 4.471500e-02 : f32
    %112 = vector.broadcast %cst_49 : f32 to vector<1x8x128xf32>
    %113 = arith.mulf %112, %109 : vector<1x8x128xf32>
    %114 = arith.mulf %113, %109 : vector<1x8x128xf32>
    %115 = arith.mulf %114, %109 : vector<1x8x128xf32>
    %116 = arith.addf %109, %115 : vector<1x8x128xf32>
    %cst_50 = arith.constant 0.797884583 : f32
    %117 = vector.broadcast %cst_50 : f32 to vector<1x8x128xf32>
    %118 = arith.mulf %117, %116 : vector<1x8x128xf32>
    %119 = math.tanh %118 : vector<1x8x128xf32>
    %cst_51 = arith.constant 1.000000e+00 : f32
    %120 = vector.broadcast %cst_51 : f32 to vector<1x8x128xf32>
    %121 = arith.addf %120, %119 : vector<1x8x128xf32>
    %122 = arith.mulf %111, %121 : vector<1x8x128xf32>
    %c0_52 = arith.constant 0 : index
    %c0_53 = arith.constant 0 : index
    %c0_54 = arith.constant 0 : index
    %123 = vector.load %arg7[%c0_52, %c0_53, %c0_54] : memref<1x8x128xf32, #tpu.memory_space<vmem>>, vector<1x8x128xf32>
    tpu.vector_store %arg7[%c0_52, %c0_53, %c0_54], %122 {strides = array<i32>} : memref<1x8x128xf32, #tpu.memory_space<vmem>>, vector<1x8x128xf32>,
    return
  }
  func.func @transform_0(%arg0: i32) -> (i32, i32, i32) {
    %c0_i32 = arith.constant 0 : i32
    %c0_i32_0 = arith.constant 0 : i32
    %c0_i32_1 = arith.constant 0 : i32
    return %arg0, %c0_i32, %c0_i32_0 : i32, i32, i32
  }
  func.func @transform_1(%arg0: i32) -> (i32, i32) {
    %c0_i32 = arith.constant 0 : i32
    %c0_i32_0 = arith.constant 0 : i32
    %c0_i32_1 = arith.constant 0 : i32
    return %c0_i32, %c0_i32_0 : i32, i32
  }
  func.func @transform_2(%arg0: i32) -> (i32, i32) {
    %c0_i32 = arith.constant 0 : i32
    %c0_i32_0 = arith.constant 0 : i32
    %c0_i32_1 = arith.constant 0 : i32
    return %c0_i32, %c0_i32_0 : i32, i32
  }
  func.func @transform_3(%arg0: i32) -> (i32, i32, i32, i32) {
    %c0_i32 = arith.constant 0 : i32
    %c0_i32_0 = arith.constant 0 : i32
    %c0_i32_1 = arith.constant 0 : i32
    %c0_i32_2 = arith.constant 0 : i32
    %c0_i32_3 = arith.constant 0 : i32
    return %c0_i32, %c0_i32_0, %c0_i32_1, %c0_i32_2 : i32, i32, i32, i32
  }
  func.func @transform_4(%arg0: i32) -> (i32, i32, i32) {
    %c0_i32 = arith.constant 0 : i32
    %c0_i32_0 = arith.constant 0 : i32
    %c0_i32_1 = arith.constant 0 : i32
    %c0_i32_2 = arith.constant 0 : i32
    return %c0_i32, %c0_i32_0, %c0_i32_1 : i32, i32, i32
  }
  func.func @transform_5(%arg0: i32) -> (i32, i32, i32) {
    %c0_i32 = arith.constant 0 : i32
    %c0_i32_0 = arith.constant 0 : i32
    %c0_i32_1 = arith.constant 0 : i32
    %c0_i32_2 = arith.constant 0 : i32
    return %c0_i32, %c0_i32_0, %c0_i32_1 : i32, i32, i32
  }
  func.func @transform_6(%arg0: i32) -> (i32, i32, i32) {
    %c0_i32 = arith.constant 0 : i32
    %c0_i32_0 = arith.constant 0 : i32
    %c0_i32_1 = arith.constant 0 : i32
    return %arg0, %c0_i32, %c0_i32_0 : i32, i32, i32
  }
}

</mosaic_0001>

<llo_original>
// kernel: tpu_custom_call.1
$region0: #{tpu_custom_call.1}
  #allocation0 [shape = 'u32[]', space=smem, size = 0x4, offset = 0x4, fixed_abs, tag = 'smem constant byte address 0x4 - core index']
  #allocation1 [shape = 'u32[144,128]{1,0:T(1,128)}', space=vmem, size = 0x12000, scoped, tag = 'internal scratch']
  %s0 = inlined_call_operand.hbm [shape: f32[2,8,128], index: 0, kind: input, shape index: {}]
  %s1 = inlined_call_operand.hbm [shape: bf16[128,16], index: 1, kind: input, shape index: {}]
  %s2 = inlined_call_operand.hbm [shape: bf16[16,128], index: 2, kind: input, shape index: {}]
  %s3 = inlined_call_operand.hbm [shape: bf16[4,8,8,8], index: 3, kind: input, shape index: {}]
  %s4 = inlined_call_operand.hbm [shape: bf16[2,8,8], index: 4, kind: input, shape index: {}]
  %s5 = inlined_call_operand.hbm [shape: f32[2,8,1], index: 5, kind: input, shape index: {}]
  %s6 = inlined_call_operand.hbm [shape: f32[2,8,128], index: 6, kind: output, shape index: {}]
  %s7 = sld [smem:[#allocation0]]
  $region81: #{tpu_custom_call.1} parent=0
    _
  %s9 = ssub.s32 1, %s7
  %s10 = scalar_select 0, %s9, %s7
  $region1: #{tpu_custom_call.1} parent=0
    #allocation2 [shape = 'u8[8192]{0}', space=vmem, size = 0x2000, scoped, tag = 'input window, operand 0']
    #allocation3 [shape = 's32[2]{0}', space=sflag, size = 0x8, scoped, tag = 'scoped memory for tpu_custom_call.1']
    #allocation4 [shape = 's32[2]{0}', space=sflag, size = 0x8, scoped, tag = 'scoped memory for tpu_custom_call.1']
    #allocation5 [shape = 'u8[32768]{0}', space=vmem, size = 0x8000, scoped, tag = 'input window, operand 1, single buffered']
    #allocation6 [shape = 's32[1]{0}', space=sflag, size = 0x4, scoped, tag = 'scoped memory for tpu_custom_call.1']
    #allocation7 [shape = 'u8[4096]{0}', space=vmem, size = 0x1000, scoped, tag = 'input window, operand 2, single buffered']
    #allocation8 [shape = 'u8[65536]{0}', space=vmem, size = 0x10000, scoped, tag = 'input window, operand 3, single buffered']
    #allocation9 [shape = 's32[1]{0}', space=sflag, size = 0x4, scoped, tag = 'scoped memory for tpu_custom_call.1']
    #allocation10 [shape = 'u8[4096]{0}', space=vmem, size = 0x1000, scoped, tag = 'input window, operand 4, single buffered']
    #allocation11 [shape = 'u8[8192]{0}', space=vmem, size = 0x2000, scoped, tag = 'input window, operand 5, single buffered']
    #allocation12 [shape = 's32[1]{0}', space=sflag, size = 0x4, scoped, tag = 'scoped memory for tpu_custom_call.1']
    #allocation13 [shape = 'u8[8192]{0}', space=vmem, size = 0x2000, scoped, tag = 'output window, operand 0']
    %11 = vsyncpa [#allocation3], 0
    %s12 = scalar_lea.sflag [#allocation3], 1
    %13 = vsyncpa %s12, 0
    %14 = vsyncpa [#allocation6], 0
    %15 = vsyncpa [#allocation9], 0
    %16 = vsyncpa [#allocation12], 0
    %17 = vsyncpa [#allocation4], 0
    %s18 = scalar_lea.sflag [#allocation4], 1
    %19 = vsyncpa %s18, 0
    loop: start=0, step=1, limit=4
    $region2: #{tpu_custom_call.1} parent=1 // loop_pre_header
      _
    $region3: #{tpu_custom_call.1} parent=1 // loop_header
      %s21 = sphi 0, %s25
      %p22 = scmp.ge.s32.totalorder %s21, 4
      %s31 = sphi 0, %s33
      %s34 = sphi 0, %s31
      %s35 = sphi 0, %s34
      %s51 = sphi 0, %s35
      %s55 = sphi 0, %s55
      %s57 = sphi 0, %s55
      %s58 = sphi 0, %s57
      %s72 = sphi 0, %s58
      %s76 = sphi 0, %s76
      %s78 = sphi 0, %s76
      %s79 = sphi 0, %s78
      %s93 = sphi 0, %s79
      %s97 = sphi 0, %s97
      %s99 = sphi 0, %s97
      %s100 = sphi 0, %s99
      %s114 = sphi 0, %s100
      %s118 = sphi 0, %s118
      %s120 = sphi 0, %s118
      %s121 = sphi 0, %s120
      %s135 = sphi 0, %s121
      %s139 = sphi 0, %s139
      %s141 = sphi 0, %s139
      %s142 = sphi 0, %s141
      %s156 = sphi 0, %s142
      %s162 = sphi 0, %s164
      %s165 = sphi 0, %s162
      %s166 = sphi 0, %s165
      %s182 = sphi 0, %s166
    $region4: #{tpu_custom_call.1} parent=1 // loop_header_branch
      %24 = sbr.rel (%p22) target = $region8
    $region5: #{tpu_custom_call.1} parent=1 // loop_body
      %s26 = ssub.s32 %s21, 1
      %s27 = ssub.s32 %s21, 2
      %s28 = sadd.s32 %s21, 1
      %s29 = ssub.s32 %s21, %s28
      %p30 = scmp.eq.s32.totalorder %s29, 0
      %s32 = sadd.s32 %s31, 1
      %s33 = scalar_select %p30, %s31, %s32
      %p36 = pneg %p30
      %p37 = scmp.eq.s32.totalorder %s21, 1
      %p38 = por %p36, %p37
      %p39 = scmp.ne.s32.totalorder %s31, %s34
      %p40 = scmp.eq.s32.totalorder %s21, 0
      %p41 = por %p39, %p40
      %p42 = scmp.ne.s32.totalorder %s31, %s34
      %p43 = scmp.eq.s32.totalorder %s26, 1
      %p44 = por %p42, %p43
      %p45 = scmp.ne.s32.totalorder %s34, %s35
      %p46 = scmp.eq.s32.totalorder %s26, 0
      %p47 = por %p45, %p46
      %p48 = scmp.ne.s32.totalorder %s34, %s35
      %p49 = scmp.eq.s32.totalorder %s27, 1
      %p50 = por %p48, %p49
      %p52 = scmp.ne.s32.totalorder %s35, %s51
      %p53 = scmp.eq.s32.totalorder %s27, 0
      %p54 = por %p52, %p53
      %s56 = sadd.s32 %s55, 1
      %p59 = scmp.eq.s32.totalorder %s21, 1
      %p60 = scmp.ne.s32.totalorder %s55, %s57
      %p61 = scmp.eq.s32.totalorder %s21, 0
      %p62 = por %p60, %p61
      %p63 = scmp.ne.s32.totalorder %s55, %s57
      %p64 = scmp.eq.s32.totalorder %s26, 1
      %p65 = por %p63, %p64
      %p66 = scmp.ne.s32.totalorder %s57, %s58
      %p67 = scmp.eq.s32.totalorder %s26, 0
      %p68 = por %p66, %p67
      %p69 = scmp.ne.s32.totalorder %s57, %s58
      %p70 = scmp.eq.s32.totalorder %s27, 1
      %p71 = por %p69, %p70
      %p73 = scmp.ne.s32.totalorder %s58, %s72
      %p74 = scmp.eq.s32.totalorder %s27, 0
      %p75 = por %p73, %p74
      %s77 = sadd.s32 %s76, 1
      %p80 = scmp.eq.s32.totalorder %s21, 1
      %p81 = scmp.ne.s32.totalorder %s76, %s78
      %p82 = scmp.eq.s32.totalorder %s21, 0
      %p83 = por %p81, %p82
      %p84 = scmp.ne.s32.totalorder %s76, %s78
      %p85 = scmp.eq.s32.totalorder %s26, 1
      %p86 = por %p84, %p85
      %p87 = scmp.ne.s32.totalorder %s78, %s79
      %p88 = scmp.eq.s32.totalorder %s26, 0
      %p89 = por %p87, %p88
      %p90 = scmp.ne.s32.totalorder %s78, %s79
      %p91 = scmp.eq.s32.totalorder %s27, 1
      %p92 = por %p90, %p91
      %p94 = scmp.ne.s32.totalorder %s79, %s93
      %p95 = scmp.eq.s32.totalorder %s27, 0
      %p96 = por %p94, %p95
      %s98 = sadd.s32 %s97, 1
      %p101 = scmp.eq.s32.totalorder %s21, 1
      %p102 = scmp.ne.s32.totalorder %s97, %s99
      %p103 = scmp.eq.s32.totalorder %s21, 0
      %p104 = por %p102, %p103
      %p105 = scmp.ne.s32.totalorder %s97, %s99
      %p106 = scmp.eq.s32.totalorder %s26, 1
      %p107 = por %p105, %p106
      %p108 = scmp.ne.s32.totalorder %s99, %s100
      %p109 = scmp.eq.s32.totalorder %s26, 0
      %p110 = por %p108, %p109
      %p111 = scmp.ne.s32.totalorder %s99, %s100
      %p112 = scmp.eq.s32.totalorder %s27, 1
      %p113 = por %p111, %p112
      %p115 = scmp.ne.s32.totalorder %s100, %s114
      %p116 = scmp.eq.s32.totalorder %s27, 0
      %p117 = por %p115, %p116
      %s119 = sadd.s32 %s118, 1
      %p122 = scmp.eq.s32.totalorder %s21, 1
      %p123 = scmp.ne.s32.totalorder %s118, %s120
      %p124 = scmp.eq.s32.totalorder %s21, 0
      %p125 = por %p123, %p124
      %p126 = scmp.ne.s32.totalorder %s118, %s120
      %p127 = scmp.eq.s32.totalorder %s26, 1
      %p128 = por %p126, %p127
      %p129 = scmp.ne.s32.totalorder %s120, %s121
      %p130 = scmp.eq.s32.totalorder %s26, 0
      %p131 = por %p129, %p130
      %p132 = scmp.ne.s32.totalorder %s120, %s121
      %p133 = scmp.eq.s32.totalorder %s27, 1
      %p134 = por %p132, %p133
      %p136 = scmp.ne.s32.totalorder %s121, %s135
      %p137 = scmp.eq.s32.totalorder %s27, 0
      %p138 = por %p136, %p137
      %s140 = sadd.s32 %s139, 1
      %p143 = scmp.eq.s32.totalorder %s21, 1
      %p144 = scmp.ne.s32.totalorder %s139, %s141
      %p145 = scmp.eq.s32.totalorder %s21, 0
      %p146 = por %p144, %p145
      %p147 = scmp.ne.s32.totalorder %s139, %s141
      %p148 = scmp.eq.s32.totalorder %s26, 1
      %p149 = por %p147, %p148
      %p150 = scmp.ne.s32.totalorder %s141, %s142
      %p151 = scmp.eq.s32.totalorder %s26, 0
      %p152 = por %p150, %p151
      %p153 = scmp.ne.s32.totalorder %s141, %s142
      %p154 = scmp.eq.s32.totalorder %s27, 1
      %p155 = por %p153, %p154
      %p157 = scmp.ne.s32.totalorder %s142, %s156
      %p158 = scmp.eq.s32.totalorder %s27, 0
      %p159 = por %p157, %p158
      %s160 = ssub.s32 %s21, %s28
      %p161 = scmp.eq.s32.totalorder %s160, 0
      %s163 = sadd.s32 %s162, 1
      %s164 = scalar_select %p161, %s162, %s163
      %p167 = pneg %p161
      %p168 = scmp.eq.s32.totalorder %s21, 1
      %p169 = por %p167, %p168
      %p170 = scmp.ne.s32.totalorder %s162, %s165
      %p171 = scmp.eq.s32.totalorder %s21, 0
      %p172 = por %p170, %p171
      %p173 = scmp.ne.s32.totalorder %s162, %s165
      %p174 = scmp.eq.s32.totalorder %s26, 1
      %p175 = por %p173, %p174
      %p176 = scmp.ne.s32.totalorder %s165, %s166
      %p177 = scmp.eq.s32.totalorder %s26, 0
      %p178 = por %p176, %p177
      %p179 = scmp.ne.s32.totalorder %s165, %s166
      %p180 = scmp.eq.s32.totalorder %s27, 1
      %p181 = por %p179, %p180
      %p183 = scmp.ne.s32.totalorder %s166, %s182
      %p184 = scmp.eq.s32.totalorder %s27, 0
      %p185 = por %p183, %p184
      %p186 = scmp.le.s32.totalorder 1, %s21
      %p187 = scmp.lt.s32.totalorder %s21, 3
      %p188 = pnand %p186, %p187
      %p189 = pneg %p188
      // Predicated region
      $region9: #{tpu_custom_call.1} parent=5 // pred_check
        _
      $region10: #{tpu_custom_call.1} parent=5 // pred_check_branch
        %191 = sbr.rel (%p188) target = $region12
      $region11: #{tpu_custom_call.1} parent=5 // pred_region
        %s192 = ssub.s32 %s21, 1
        // Predicated region
        $region13: #{tpu_custom_call.1} parent=11 // pred_check
          %p193 = pneg %p68
        $region14: #{tpu_custom_call.1} parent=11 // pred_check_branch
          %195 = sbr.rel (%p193) target = $region16
        $region15: #{tpu_custom_call.1} parent=11 // pred_region
          %s197 = ssub.s32 1024, 1024
          %198 = vsyncadd [#allocation6], %s197
          %s199 = sshll.u32 [#allocation5], 4
          %s200 = int_to_ptr.vmem [resolvable:$true] %s199
          %205 = dma.hbm_to_vmem [thread:$0]  %s1, 1024, %s200, [#allocation6], 64, 64, 4
        $region16: #{tpu_custom_call.1} parent=11 // pred_fallthru
          _
        // Predicated region
        $region17: #{tpu_custom_call.1} parent=11 // pred_check
          %p206 = pneg %p89
        $region18: #{tpu_custom_call.1} parent=11 // pred_check_branch
          %208 = sbr.rel (%p206) target = $region20
        $region19: #{tpu_custom_call.1} parent=11 // pred_region
          %s210 = ssub.s32 128, 128
          %211 = vsyncadd [#allocation6], %s210
          %s212 = sshll.u32 [#allocation7], 4
          %s213 = int_to_ptr.vmem [resolvable:$true] %s212
          %218 = dma.hbm_to_vmem [thread:$0]  %s2, 128, %s213, [#allocation6], 64, 64, 4
        $region20: #{tpu_custom_call.1} parent=11 // pred_fallthru
          _
        // Predicated region
        $region21: #{tpu_custom_call.1} parent=11 // pred_check
          %p219 = pneg %p110
        $region22: #{tpu_custom_call.1} parent=11 // pred_check_branch
          %221 = sbr.rel (%p219) target = $region24
        $region23: #{tpu_custom_call.1} parent=11 // pred_region
          %s223 = ssub.s32 2048, 2048
          %224 = vsyncadd [#allocation9], %s223
          %s225 = sshll.u32 [#allocation8], 4
          %s226 = int_to_ptr.vmem [resolvable:$true] %s225
          %231 = dma.hbm_to_vmem [thread:$0]  %s3, 2048, %s226, [#allocation9], 64, 64, 4
        $region24: #{tpu_custom_call.1} parent=11 // pred_fallthru
          _
        // Predicated region
        $region25: #{tpu_custom_call.1} parent=11 // pred_check
          %p232 = pneg %p131
        $region26: #{tpu_custom_call.1} parent=11 // pred_check_branch
          %234 = sbr.rel (%p232) target = $region28
        $region27: #{tpu_custom_call.1} parent=11 // pred_region
          %s236 = ssub.s32 128, 128
          %237 = vsyncadd [#allocation9], %s236
          %s238 = sshll.u32 [#allocation10], 4
          %s239 = int_to_ptr.vmem [resolvable:$true] %s238
          %244 = dma.hbm_to_vmem [thread:$0]  %s4, 128, %s239, [#allocation9], 64, 64, 4
        $region28: #{tpu_custom_call.1} parent=11 // pred_fallthru
          _
        // Predicated region
        $region29: #{tpu_custom_call.1} parent=11 // pred_check
          %p245 = pneg %p152
        $region30: #{tpu_custom_call.1} parent=11 // pred_check_branch
          %247 = sbr.rel (%p245) target = $region32
        $region31: #{tpu_custom_call.1} parent=11 // pred_region
          %s249 = ssub.s32 256, 256
          %250 = vsyncadd [#allocation12], %s249
          %s251 = sshll.u32 [#allocation11], 4
          %s252 = int_to_ptr.vmem [resolvable:$true] %s251
          %257 = dma.hbm_to_vmem [thread:$0]  %s5, 256, %s252, [#allocation12], 128, 128, 8
        $region32: #{tpu_custom_call.1} parent=11 // pred_fallthru
          _
      $region12: #{tpu_custom_call.1} parent=5 // pred_fallthru
        _
      %p258 = scmp.lt.s32.totalorder %s21, 2
      // Predicated region
      $region33: #{tpu_custom_call.1} parent=5 // pred_check
        %p259 = pneg %p258
      $region34: #{tpu_custom_call.1} parent=5 // pred_check_branch
        %261 = sbr.rel (%p259) target = $region36
      $region35: #{tpu_custom_call.1} parent=5 // pred_region
        // Predicated region
        $region37: #{tpu_custom_call.1} parent=35 // pred_check
          %p262 = pneg %p41
        $region38: #{tpu_custom_call.1} parent=35 // pred_check_branch
          %264 = sbr.rel (%p262) target = $region40
        $region39: #{tpu_custom_call.1} parent=35 // pred_region
          %s265 = sand.u32 %s31, 1
          %s266 = scalar_lea.sflag [#allocation3], %s265
          %s267 = sand.u32 %s31, 1
          %s268 = smul.addr %s267, 8
          %s269 = scalar_lea.vmem [#allocation2], %s268
          %s271 = ssub.s32 128, 128
          %272 = vsyncadd %s266, %s271
          %s273 = smul.addr %s21, 128
          %s274 = scalar_lea.hbm %s0, %s273
          %s276 = sshll.u32 %s269, 4
          %s277 = int_to_ptr.vmem [resolvable:$true] %s276
          %279 = dma.hbm_to_vmem [thread:$0]  %s274, 128, %s277, %s266
        $region40: #{tpu_custom_call.1} parent=35 // pred_fallthru
          _
      $region36: #{tpu_custom_call.1} parent=5 // pred_fallthru
        _
      %p280 = scmp.le.s32.totalorder 1, %s21
      %p281 = scmp.lt.s32.totalorder %s21, 3
      %p282 = pnand %p280, %p281
      %p283 = pneg %p282
      // Predicated region
      $region41: #{tpu_custom_call.1} parent=5 // pred_check
        _
      $region42: #{tpu_custom_call.1} parent=5 // pred_check_branch
        %285 = sbr.rel (%p282) target = $region44
      $region43: #{tpu_custom_call.1} parent=5 // pred_region
        %s286 = ssub.s32 %s21, 1
        %s287 = sand.u32 %s34, 1
        %s288 = scalar_lea.sflag [#allocation3], %s287
        %s289 = sand.u32 %s34, 1
        %s290 = smul.addr %s289, 8
        %s291 = scalar_lea.vmem [#allocation2], %s290
        // Predicated region
        $region45: #{tpu_custom_call.1} parent=43 // pred_check
          %p292 = pneg %p47
        $region46: #{tpu_custom_call.1} parent=43 // pred_check_branch
          %294 = sbr.rel (%p292) target = $region48
        $region47: #{tpu_custom_call.1} parent=43 // pred_region
          %295 = dma.done %s288, 128
        $region48: #{tpu_custom_call.1} parent=43 // pred_fallthru
          _
        // Predicated region
        $region49: #{tpu_custom_call.1} parent=43 // pred_check
          %p296 = pneg %p68
        $region50: #{tpu_custom_call.1} parent=43 // pred_check_branch
          %298 = sbr.rel (%p296) target = $region52
        $region51: #{tpu_custom_call.1} parent=43 // pred_region
          %299 = dma.done [#allocation6], 1024
        $region52: #{tpu_custom_call.1} parent=43 // pred_fallthru
          _
        // Predicated region
        $region53: #{tpu_custom_call.1} parent=43 // pred_check
          %p300 = pneg %p89
        $region54: #{tpu_custom_call.1} parent=43 // pred_check_branch
          %302 = sbr.rel (%p300) target = $region56
        $region55: #{tpu_custom_call.1} parent=43 // pred_region
          %303 = dma.done [#allocation6], 128
        $region56: #{tpu_custom_call.1} parent=43 // pred_fallthru
          _
        // Predicated region
        $region57: #{tpu_custom_call.1} parent=43 // pred_check
          %p304 = pneg %p110
        $region58: #{tpu_custom_call.1} parent=43 // pred_check_branch
          %306 = sbr.rel (%p304) target = $region60
        $region59: #{tpu_custom_call.1} parent=43 // pred_region
          %307 = dma.done [#allocation9], 2048
        $region60: #{tpu_custom_call.1} parent=43 // pred_fallthru
          _
        // Predicated region
        $region61: #{tpu_custom_call.1} parent=43 // pred_check
          %p308 = pneg %p131
        $region62: #{tpu_custom_call.1} parent=43 // pred_check_branch
          %310 = sbr.rel (%p308) target = $region64
        $region63: #{tpu_custom_call.1} parent=43 // pred_region
          %311 = dma.done [#allocation9], 128
        $region64: #{tpu_custom_call.1} parent=43 // pred_fallthru
          _
        // Predicated region
        $region65: #{tpu_custom_call.1} parent=43 // pred_check
          %p312 = pneg %p152
        $region66: #{tpu_custom_call.1} parent=43 // pred_check_branch
          %314 = sbr.rel (%p312) target = $region68
        $region67: #{tpu_custom_call.1} parent=43 // pred_region
          %315 = dma.done [#allocation12], 256
        $region68: #{tpu_custom_call.1} parent=43 // pred_fallthru
          _
        %s316 = sand.u32 %s34, 1
        %s317 = scalar_lea.sflag [#allocation3], %s316
        %s318 = sand.u32 %s34, 1
        %s319 = smul.addr %s318, 8
        %s320 = scalar_lea.vmem [#allocation2], %s319
        %p321 = pneg %p47
        %p322 = pneg %p44
        %p323 = pneg %p68
        %p324 = pneg %p65
        %p325 = pneg %p89
        %p326 = pneg %p86
        %p327 = pneg %p110
        %p328 = pneg %p107
        %p329 = pneg %p131
        %p330 = pneg %p128
        %p331 = pneg %p152
        %p332 = pneg %p149
        %p333 = pneg %p178
        %p334 = pneg %p175
        %s335 = sand.u32 %s165, 1
        %s336 = scalar_lea.sflag [#allocation4], %s335
        %s337 = sand.u32 %s165, 1
        %s338 = smul.addr %s337, 8
        %s339 = scalar_lea.vmem [#allocation13], %s338
        %v341 = vld [vmem:[%s291] sm:$0xff]
        %v342 = vpack.c.bf16 %v341, %v341
        %v343 = vld [vmem:[#allocation5] sm:$0xf]
        %v344 = vld [vmem:[#allocation5 + $0x4] sm:$0xf]
        %v345 = vld [vmem:[#allocation5 + $0x8] sm:$0xf]
        %v346 = vld [vmem:[#allocation5 + $0xc] sm:$0xf]
        %v347 = vld [vmem:[#allocation5 + $0x10] sm:$0xf]
        %v348 = vld [vmem:[#allocation5 + $0x14] sm:$0xf]
        %v349 = vld [vmem:[#allocation5 + $0x18] sm:$0xf]
        %v350 = vld [vmem:[#allocation5 + $0x1c] sm:$0xf]
        %v351 = vld [vmem:[#allocation5 + $0x20] sm:$0xf]
        %v352 = vld [vmem:[#allocation5 + $0x24] sm:$0xf]
        %v353 = vld [vmem:[#allocation5 + $0x28] sm:$0xf]
        %v354 = vld [vmem:[#allocation5 + $0x2c] sm:$0xf]
        %v355 = vld [vmem:[#allocation5 + $0x30] sm:$0xf]
        %v356 = vld [vmem:[#allocation5 + $0x34] sm:$0xf]
        %v357 = vld [vmem:[#allocation5 + $0x38] sm:$0xf]
        %v358 = vld [vmem:[#allocation5 + $0x3c] sm:$0xf]
        %v375 = vunpack.c.l.b16 %v343
        %v376 = vunpack.c.l.b16 %v344
        %v377 = vunpack.c.l.b16 %v345
        %v378 = vunpack.c.l.b16 %v346
        %v379 = vunpack.c.l.b16 %v347
        %v380 = vunpack.c.l.b16 %v348
        %v381 = vunpack.c.l.b16 %v349
        %v382 = vunpack.c.l.b16 %v350
        %v383 = vunpack.c.l.b16 %v351
        %v384 = vunpack.c.l.b16 %v352
        %v385 = vunpack.c.l.b16 %v353
        %v386 = vunpack.c.l.b16 %v354
        %v387 = vunpack.c.l.b16 %v355
        %v388 = vunpack.c.l.b16 %v356
        %v389 = vunpack.c.l.b16 %v357
        %v390 = vunpack.c.l.b16 %v358
        %v391 = vpack.c.b16 %v376, %v375
        %v392 = vpack.c.b16 %v378, %v377
        %v393 = vpack.c.b16 %v380, %v379
        %v394 = vpack.c.b16 %v382, %v381
        %v395 = vpack.c.b16 %v384, %v383
        %v396 = vpack.c.b16 %v386, %v385
        %v397 = vpack.c.b16 %v388, %v387
        %v398 = vpack.c.b16 %v390, %v389
        %407 = vmatprep.subr.bf16.mxu0 0
        %408 = vmatpush1.bf16.msra.mxu0 %v391
        %409 = vmatprep.subr.bf16.mxu0 0
        %410 = vmatpush1.bf16.msra.mxu0 %v392
        %411 = vmatprep.subr.bf16.mxu0 0
        %412 = vmatpush1.bf16.msra.mxu0 %v393
        %413 = vmatprep.subr.bf16.mxu0 0
        %414 = vmatpush1.bf16.msra.mxu0 %v394
        %415 = vmatprep.subr.bf16.mxu0 0
        %416 = vmatpush1.bf16.msra.mxu0 %v395
        %417 = vmatprep.subr.bf16.mxu0 0
        %418 = vmatpush1.bf16.msra.mxu0 %v396
        %419 = vmatprep.subr.bf16.mxu0 0
        %420 = vmatpush1.bf16.msra.mxu0 %v397
        %421 = vmatprep.subr.bf16.mxu0 0
        %422 = vmatpush1.bf16.msra.mxu0 %v398
        %423 = vmatprep.subr.bf16.mxu0 0
        %424 = vmatpush1.bf16.msra.mxu0 0
        %425 = vmatprep.subr.bf16.mxu0 0
        %426 = vmatpush1.bf16.msra.mxu0 0
        %427 = vmatprep.subr.bf16.mxu0 0
        %428 = vmatpush1.bf16.msra.mxu0 0
        %429 = vmatprep.subr.bf16.mxu0 0
        %430 = vmatpush1.bf16.msra.mxu0 0
        %431 = vmatprep.subr.bf16.mxu0 0
        %432 = vmatpush1.bf16.msra.mxu0 0
        %433 = vmatprep.subr.bf16.mxu0 0
        %434 = vmatpush1.bf16.msra.mxu0 0
        %435 = vmatprep.subr.bf16.mxu0 0
        %436 = vmatpush1.bf16.msra.mxu0 0
        %437 = vmatprep.subr.bf16.mxu0 0
        %438 = vmatpush1.bf16.msra.mxu0 0
        %439 = vmatprep.mubr.bf16.mxu0 0
        %440 = vmatmul.mubr.bf16.gmra.mrb[0].mxu0 %v342
        %v441 = vpop.f32.mrb[0].mxu0
        %v442 = vadd.f32 0.0, %v441
        %v443 = vpop.f32.mrb[0].mxu0
        %v444 = vpop.f32.mrb[0].mxu0
        %v445 = vpop.f32.mrb[0].mxu0
        %446 = vdwg.mxu0
        %v447 = vld [vmem:[#allocation8] sm:$0xf]
        %v448 = vld [vmem:[#allocation8 + $0x4] sm:$0xf]
        %v449 = vld [vmem:[#allocation8 + $0x8] sm:$0xf]
        %v450 = vld [vmem:[#allocation8 + $0xc] sm:$0xf]
        %v451 = vld [vmem:[#allocation8 + $0x10] sm:$0xf]
        %v452 = vld [vmem:[#allocation8 + $0x14] sm:$0xf]
        %v453 = vld [vmem:[#allocation8 + $0x18] sm:$0xf]
        %v454 = vld [vmem:[#allocation8 + $0x1c] sm:$0xf]
        %v455 = vunpack.c.l.bf16 %v447
        %v456 = vunpack.c.l.bf16 %v448
        %v457 = vunpack.c.l.bf16 %v449
        %v458 = vunpack.c.l.bf16 %v450
        %v459 = vunpack.c.l.bf16 %v451
        %v460 = vunpack.c.l.bf16 %v452
        %v461 = vunpack.c.l.bf16 %v453
        %v462 = vunpack.c.l.bf16 %v454
        %s463 = scalar_lea.vmem [#allocation8], 32
        %v464 = vld [vmem:[%s463] sm:$0xf]
        %v465 = vld [vmem:[%s463 + $0x4] sm:$0xf]
        %v466 = vld [vmem:[%s463 + $0x8] sm:$0xf]
        %v467 = vld [vmem:[%s463 + $0xc] sm:$0xf]
        %v468 = vld [vmem:[%s463 + $0x10] sm:$0xf]
        %v469 = vld [vmem:[%s463 + $0x14] sm:$0xf]
        %v470 = vld [vmem:[%s463 + $0x18] sm:$0xf]
        %v471 = vld [vmem:[%s463 + $0x1c] sm:$0xf]
        %v472 = vunpack.c.l.bf16 %v464
        %v473 = vunpack.c.l.bf16 %v465
        %v474 = vunpack.c.l.bf16 %v466
        %v475 = vunpack.c.l.bf16 %v467
        %v476 = vunpack.c.l.bf16 %v468
        %v477 = vunpack.c.l.bf16 %v469
        %v478 = vunpack.c.l.bf16 %v470
        %v479 = vunpack.c.l.bf16 %v471
        %v481 = vcombine.high %v442, %v442
        %v483 = vunpack.c.l.s4 1966171168
        %v484 = vunpack.c.0.s8 %v483
        %v485 = vlaneseq
        %v486 = vshrl.u32 %v485, 7
        %v487 = vsub.s32 %v484, %v486
        %v488 = vrot.slane %v442, %v487
        %v490 = vunpack.c.l.s4 1966171168
        %v491 = vunpack.c.0.s8 %v490
        %v492 = vlaneseq
        %v493 = vshrl.u32 %v492, 7
        %v494 = vsub.s32 %v491, %v493
        %v495 = vrot.slane %v481, %v494
        %v496 = vcombine.high %v488, %v488
        %v497 = vcombine.high %v495, %v495
        %v499 = vunpack.c.l.s4 1966171168
        %v500 = vunpack.c.0.s8 %v499
        %v501 = vlaneseq
        %v502 = vshrl.u32 %v501, 7
        %v503 = vsub.s32 %v500, %v502
        %v504 = vrot.slane %v488, %v503
        %v506 = vunpack.c.l.s4 1966171168
        %v507 = vunpack.c.0.s8 %v506
        %v508 = vlaneseq
        %v509 = vshrl.u32 %v508, 7
        %v510 = vsub.s32 %v507, %v509
        %v511 = vrot.slane %v495, %v510
        %v513 = vunpack.c.l.s4 1966171168
        %v514 = vunpack.c.0.s8 %v513
        %v515 = vlaneseq
        %v516 = vshrl.u32 %v515, 7
        %v517 = vsub.s32 %v514, %v516
        %v518 = vrot.slane %v496, %v517
        %v520 = vunpack.c.l.s4 1966171168
        %v521 = vunpack.c.0.s8 %v520
        %v522 = vlaneseq
        %v523 = vshrl.u32 %v522, 7
        %v524 = vsub.s32 %v521, %v523
        %v525 = vrot.slane %v497, %v524
        %v526 = vcombine.high %v504, %v504
        %v527 = vcombine.high %v511, %v511
        %v528 = vcombine.high %v518, %v518
        %v529 = vcombine.high %v525, %v525
        %v530 = vlaneseq
        %v531 = vshrl.u32 %v530, 7
        %v532 = vsub.s32 0, %v531
        %v533 = vrot.slane %v504, %v532
        %v534 = vlaneseq
        %v535 = vshrl.u32 %v534, 7
        %v536 = vsub.s32 0, %v535
        %v537 = vrot.slane %v518, %v536
        %v538 = vlaneseq
        %v539 = vshrl.u32 %v538, 7
        %v540 = vsub.s32 0, %v539
        %v541 = vrot.slane %v526, %v540
        %v542 = vlaneseq
        %v543 = vshrl.u32 %v542, 7
        %v544 = vsub.s32 0, %v543
        %v545 = vrot.slane %v528, %v544
        %v546 = vlaneseq
        %v547 = vshrl.u32 %v546, 7
        %v548 = vsub.s32 0, %v547
        %v549 = vrot.slane %v511, %v548
        %v550 = vlaneseq
        %v551 = vshrl.u32 %v550, 7
        %v552 = vsub.s32 0, %v551
        %v553 = vrot.slane %v525, %v552
        %v554 = vlaneseq
        %v555 = vshrl.u32 %v554, 7
        %v556 = vsub.s32 0, %v555
        %v557 = vrot.slane %v527, %v556
        %v558 = vlaneseq
        %v559 = vshrl.u32 %v558, 7
        %v560 = vsub.s32 0, %v559
        %v561 = vrot.slane %v529, %v560
        %v570 = vmul.f32 %v533, %v455
        %v571 = vmul.f32 %v537, %v456
        %v572 = vmul.f32 %v541, %v457
        %v573 = vmul.f32 %v545, %v458
        %v574 = vmul.f32 %v549, %v459
        %v575 = vmul.f32 %v553, %v460
        %v576 = vmul.f32 %v557, %v461
        %v577 = vmul.f32 %v561, %v462
        %586 = vrot.lane.b32.xlu0 %v472, 8
        %v587 = vpop.permute.xlu0 %586
        %588 = vrot.lane.b32.xlu0 %v473, 8
        %v589 = vpop.permute.xlu0 %588
        %590 = vrot.lane.b32.xlu0 %v474, 8
        %v591 = vpop.permute.xlu0 %590
        %592 = vrot.lane.b32.xlu0 %v475, 8
        %v593 = vpop.permute.xlu0 %592
        %594 = vrot.lane.b32.xlu0 %v476, 8
        %v595 = vpop.permute.xlu0 %594
        %596 = vrot.lane.b32.xlu0 %v477, 8
        %v597 = vpop.permute.xlu0 %596
        %598 = vrot.lane.b32.xlu0 %v478, 8
        %v599 = vpop.permute.xlu0 %598
        %600 = vrot.lane.b32.xlu0 %v479, 8
        %v601 = vpop.permute.xlu0 %600
        %v610 = vmul.f32 %v533, %v587
        %v611 = vmul.f32 %v537, %v589
        %v612 = vmul.f32 %v541, %v591
        %v613 = vmul.f32 %v545, %v593
        %v614 = vmul.f32 %v549, %v595
        %v615 = vmul.f32 %v553, %v597
        %v616 = vmul.f32 %v557, %v599
        %v617 = vmul.f32 %v561, %v601
        %626 = vrot.lane.b32.xlu0 %v610, 120
        %v627 = vpop.permute.xlu0 %626
        %628 = vrot.lane.b32.xlu0 %v611, 120
        %v629 = vpop.permute.xlu0 %628
        %630 = vrot.lane.b32.xlu0 %v612, 120
        %v631 = vpop.permute.xlu0 %630
        %632 = vrot.lane.b32.xlu0 %v613, 120
        %v633 = vpop.permute.xlu0 %632
        %634 = vrot.lane.b32.xlu0 %v614, 120
        %v635 = vpop.permute.xlu0 %634
        %636 = vrot.lane.b32.xlu0 %v615, 120
        %v637 = vpop.permute.xlu0 %636
        %638 = vrot.lane.b32.xlu0 %v616, 120
        %v639 = vpop.permute.xlu0 %638
        %640 = vrot.lane.b32.xlu0 %v617, 120
        %v641 = vpop.permute.xlu0 %640
        %v650 = vsub.f32 %v570, %v627
        %v651 = vsub.f32 %v571, %v629
        %v652 = vsub.f32 %v572, %v631
        %v653 = vsub.f32 %v573, %v633
        %v654 = vsub.f32 %v574, %v635
        %v655 = vsub.f32 %v575, %v637
        %v656 = vsub.f32 %v576, %v639
        %v657 = vsub.f32 %v577, %v641
        %vm658 = vcmask 64512
        %v659 = vsel %vm658, %v650, 0.0
        %v660 = vsel %vm658, %v651, 0.0
        %v661 = vadd.f32 %v659, %v660
        %v662 = vsel %vm658, %v652, 0.0
        %v663 = vadd.f32 %v661, %v662
        %v664 = vsel %vm658, %v653, 0.0
        %v665 = vadd.f32 %v663, %v664
        %v666 = vsel %vm658, %v654, 0.0
        %v667 = vadd.f32 %v665, %v666
        %v668 = vsel %vm658, %v655, 0.0
        %v669 = vadd.f32 %v667, %v668
        %v670 = vsel %vm658, %v656, 0.0
        %v671 = vadd.f32 %v669, %v670
        %v672 = vsel %vm658, %v657, 0.0
        %v673 = vadd.f32 %v671, %v672
        %v674 = vmul.f32 %v533, %v472
        %v675 = vmul.f32 %v537, %v473
        %v676 = vmul.f32 %v541, %v474
        %v677 = vmul.f32 %v545, %v475
        %v678 = vmul.f32 %v549, %v476
        %v679 = vmul.f32 %v553, %v477
        %v680 = vmul.f32 %v557, %v478
        %v681 = vmul.f32 %v561, %v479
        %690 = vrot.lane.b32.xlu0 %v455, 8
        %v691 = vpop.permute.xlu0 %690
        %692 = vrot.lane.b32.xlu0 %v456, 8
        %v693 = vpop.permute.xlu0 %692
        %694 = vrot.lane.b32.xlu0 %v457, 8
        %v695 = vpop.permute.xlu0 %694
        %696 = vrot.lane.b32.xlu0 %v458, 8
        %v697 = vpop.permute.xlu0 %696
        %698 = vrot.lane.b32.xlu0 %v459, 8
        %v699 = vpop.permute.xlu0 %698
        %700 = vrot.lane.b32.xlu0 %v460, 8
        %v701 = vpop.permute.xlu0 %700
        %702 = vrot.lane.b32.xlu0 %v461, 8
        %v703 = vpop.permute.xlu0 %702
        %704 = vrot.lane.b32.xlu0 %v462, 8
        %v705 = vpop.permute.xlu0 %704
        %v714 = vmul.f32 %v533, %v691
        %v715 = vmul.f32 %v537, %v693
        %v716 = vmul.f32 %v541, %v695
        %v717 = vmul.f32 %v545, %v697
        %v718 = vmul.f32 %v549, %v699
        %v719 = vmul.f32 %v553, %v701
        %v720 = vmul.f32 %v557, %v703
        %v721 = vmul.f32 %v561, %v705
        %730 = vrot.lane.b32.xlu0 %v714, 120
        %v731 = vpop.permute.xlu0 %730
        %732 = vrot.lane.b32.xlu0 %v715, 120
        %v733 = vpop.permute.xlu0 %732
        %734 = vrot.lane.b32.xlu0 %v716, 120
        %v735 = vpop.permute.xlu0 %734
        %736 = vrot.lane.b32.xlu0 %v717, 120
        %v737 = vpop.permute.xlu0 %736
        %738 = vrot.lane.b32.xlu0 %v718, 120
        %v739 = vpop.permute.xlu0 %738
        %740 = vrot.lane.b32.xlu0 %v719, 120
        %v741 = vpop.permute.xlu0 %740
        %742 = vrot.lane.b32.xlu0 %v720, 120
        %v743 = vpop.permute.xlu0 %742
        %744 = vrot.lane.b32.xlu0 %v721, 120
        %v745 = vpop.permute.xlu0 %744
        %v754 = vadd.f32 %v674, %v731
        %v755 = vadd.f32 %v675, %v733
        %v756 = vadd.f32 %v676, %v735
        %v757 = vadd.f32 %v677, %v737
        %v758 = vadd.f32 %v678, %v739
        %v759 = vadd.f32 %v679, %v741
        %v760 = vadd.f32 %v680, %v743
        %v761 = vadd.f32 %v681, %v745
        %v762 = vsel %vm658, %v754, 0.0
        %v763 = vsel %vm658, %v755, 0.0
        %v764 = vadd.f32 %v762, %v763
        %v765 = vsel %vm658, %v756, 0.0
        %v766 = vadd.f32 %v764, %v765
        %v767 = vsel %vm658, %v757, 0.0
        %v768 = vadd.f32 %v766, %v767
        %v769 = vsel %vm658, %v758, 0.0
        %v770 = vadd.f32 %v768, %v769
        %v771 = vsel %vm658, %v759, 0.0
        %v772 = vadd.f32 %v770, %v771
        %v773 = vsel %vm658, %v760, 0.0
        %v774 = vadd.f32 %v772, %v773
        %v775 = vsel %vm658, %v761, 0.0
        %v776 = vadd.f32 %v774, %v775
        %778 = vrot.lane.b32.xlu0 %v776, 8
        %v779 = vpop.permute.xlu0 %778
        %v781 = vsel %vm658, %v673, %v779
        %v782 = vpack.c.bf16 %v781, %v781
        %v783 = vld [vmem:[#allocation7] sm:$0xf]
        %v784 = vld [vmem:[#allocation7 + $0x4] sm:$0xf]
        %v787 = vunpack.c.l.b16 %v783
        %v788 = vunpack.c.l.b16 %v784
        %v789 = vpack.c.b16 %v788, %v787
        %vm791 = vcmask 130048
        %v793 = vsel %vm791, %v782, 0
        %795 = vmatprep.subr.bf16.mxu0 0
        %796 = vmatpush1.bf16.msra.mxu0 %v789
        %797 = vmatprep.subr.bf16.mxu0 0
        %798 = vmatpush1.bf16.msra.mxu0 0
        %799 = vmatprep.subr.bf16.mxu0 0
        %800 = vmatpush1.bf16.msra.mxu0 0
        %801 = vmatprep.subr.bf16.mxu0 0
        %802 = vmatpush1.bf16.msra.mxu0 0
        %803 = vmatprep.subr.bf16.mxu0 0
        %804 = vmatpush1.bf16.msra.mxu0 0
        %805 = vmatprep.subr.bf16.mxu0 0
        %806 = vmatpush1.bf16.msra.mxu0 0
        %807 = vmatprep.subr.bf16.mxu0 0
        %808 = vmatpush1.bf16.msra.mxu0 0
        %809 = vmatprep.subr.bf16.mxu0 0
        %810 = vmatpush1.bf16.msra.mxu0 0
        %811 = vmatprep.subr.bf16.mxu0 0
        %812 = vmatpush1.bf16.msra.mxu0 0
        %813 = vmatprep.subr.bf16.mxu0 0
        %814 = vmatpush1.bf16.msra.mxu0 0
        %815 = vmatprep.subr.bf16.mxu0 0
        %816 = vmatpush1.bf16.msra.mxu0 0
        %817 = vmatprep.subr.bf16.mxu0 0
        %818 = vmatpush1.bf16.msra.mxu0 0
        %819 = vmatprep.subr.bf16.mxu0 0
        %820 = vmatpush1.bf16.msra.mxu0 0
        %821 = vmatprep.subr.bf16.mxu0 0
        %822 = vmatpush1.bf16.msra.mxu0 0
        %823 = vmatprep.subr.bf16.mxu0 0
        %824 = vmatpush1.bf16.msra.mxu0 0
        %825 = vmatprep.subr.bf16.mxu0 0
        %826 = vmatpush1.bf16.msra.mxu0 0
        %827 = vmatprep.mubr.bf16.mxu0 0
        %828 = vmatmul.mubr.bf16.gmra.mrb[0].mxu0 %v793
        %v829 = vpop.f32.mrb[0].mxu0
        %v830 = vadd.f32 0.0, %v829
        %v831 = vpop.f32.mrb[0].mxu0
        %v832 = vpop.f32.mrb[0].mxu0
        %v833 = vpop.f32.mrb[0].mxu0
        %834 = vdwg.mxu0
        %v835 = vld [vmem:[#allocation10] sm:$0xf]
        %v837 = vsel %vm658, %v835, 0
        %vm839 = vcmask 1043456
        %v841 = vsel %vm839, %v342, 0
        %843 = vmatprep.subr.bf16.mxu0 0
        %844 = vmatpush1.bf16.msra.mxu0 %v841
        %845 = vmatprep.subr.bf16.mxu0 0
        %846 = vmatpush1.bf16.msra.mxu0 0
        %847 = vmatprep.subr.bf16.mxu0 0
        %848 = vmatpush1.bf16.msra.mxu0 0
        %849 = vmatprep.subr.bf16.mxu0 0
        %850 = vmatpush1.bf16.msra.mxu0 0
        %851 = vmatprep.subr.bf16.mxu0 0
        %852 = vmatpush1.bf16.msra.mxu0 0
        %853 = vmatprep.subr.bf16.mxu0 0
        %854 = vmatpush1.bf16.msra.mxu0 0
        %855 = vmatprep.subr.bf16.mxu0 0
        %856 = vmatpush1.bf16.msra.mxu0 0
        %857 = vmatprep.subr.bf16.mxu0 0
        %858 = vmatpush1.bf16.msra.mxu0 0
        %859 = vmatprep.subr.bf16.mxu0 0
        %860 = vmatpush1.bf16.msra.mxu0 0
        %861 = vmatprep.subr.bf16.mxu0 0
        %862 = vmatpush1.bf16.msra.mxu0 0
        %863 = vmatprep.subr.bf16.mxu0 0
        %864 = vmatpush1.bf16.msra.mxu0 0
        %865 = vmatprep.subr.bf16.mxu0 0
        %866 = vmatpush1.bf16.msra.mxu0 0
        %867 = vmatprep.subr.bf16.mxu0 0
        %868 = vmatpush1.bf16.msra.mxu0 0
        %869 = vmatprep.subr.bf16.mxu0 0
        %870 = vmatpush1.bf16.msra.mxu0 0
        %871 = vmatprep.subr.bf16.mxu0 0
        %872 = vmatpush1.bf16.msra.mxu0 0
        %873 = vmatprep.subr.bf16.mxu0 0
        %874 = vmatpush1.bf16.msra.mxu0 0
        %875 = vmatprep.mubr.bf16.mxu0 0
        %876 = vmatmul.mubr.bf16.gmra.mrb[0].mxu0 %v837
        %v877 = vpop.f32.mrb[0].mxu0
        %v878 = vadd.f32 0.0, %v877
        %v879 = vpop.f32.mrb[0].mxu0
        %v880 = vpop.f32.mrb[0].mxu0
        %v881 = vpop.f32.mrb[0].mxu0
        %882 = vdwg.mxu0
        %v883 = vadd.f32 %v830, %v878
        %v884 = vld [vmem:[#allocation11] sm:$0xff]
        %886 = vset.pattern.permute.xlu0 0
        %887 = vperm.xlu0 %886, %v884
        %v888 = vpop.permute.xlu0 %887
        %v890 = vadd.f32 %v883, %v888
        %v891 = vmul.f32 %v890, 0.5
        %v892 = vmul.f32 %v890, 0.044715
        %v893 = vmul.f32 %v892, %v890
        %v894 = vmul.f32 %v893, %v890
        %v895 = vadd.f32 %v890, %v894
        %v896 = vmul.f32 %v895, 0.7978846
        %v897 = vtanh.pop %v896
        %v898 = vadd.f32 %v897, 1.0
        %v899 = vmul.f32 %v891, %v898
        %v900 = vpack.c.bf16 %v899, %v899
        %901 = vmatprep.subr.bf16.mxu0 0
        %902 = vmatpush1.bf16.msra.mxu0 %v391
        %903 = vmatprep.subr.bf16.mxu0 0
        %904 = vmatpush1.bf16.msra.mxu0 %v392
        %905 = vmatprep.subr.bf16.mxu0 0
        %906 = vmatpush1.bf16.msra.mxu0 %v393
        %907 = vmatprep.subr.bf16.mxu0 0
        %908 = vmatpush1.bf16.msra.mxu0 %v394
        %909 = vmatprep.subr.bf16.mxu0 0
        %910 = vmatpush1.bf16.msra.mxu0 %v395
        %911 = vmatprep.subr.bf16.mxu0 0
        %912 = vmatpush1.bf16.msra.mxu0 %v396
        %913 = vmatprep.subr.bf16.mxu0 0
        %914 = vmatpush1.bf16.msra.mxu0 %v397
        %915 = vmatprep.subr.bf16.mxu0 0
        %916 = vmatpush1.bf16.msra.mxu0 %v398
        %917 = vmatprep.subr.bf16.mxu0 0
        %918 = vmatpush1.bf16.msra.mxu0 0
        %919 = vmatprep.subr.bf16.mxu0 0
        %920 = vmatpush1.bf16.msra.mxu0 0
        %921 = vmatprep.subr.bf16.mxu0 0
        %922 = vmatpush1.bf16.msra.mxu0 0
        %923 = vmatprep.subr.bf16.mxu0 0
        %924 = vmatpush1.bf16.msra.mxu0 0
        %925 = vmatprep.subr.bf16.mxu0 0
        %926 = vmatpush1.bf16.msra.mxu0 0
        %927 = vmatprep.subr.bf16.mxu0 0
        %928 = vmatpush1.bf16.msra.mxu0 0
        %929 = vmatprep.subr.bf16.mxu0 0
        %930 = vmatpush1.bf16.msra.mxu0 0
        %931 = vmatprep.subr.bf16.mxu0 0
        %932 = vmatpush1.bf16.msra.mxu0 0
        %933 = vmatprep.mubr.bf16.mxu0 0
        %934 = vmatmul.mubr.bf16.gmra.mrb[0].mxu0 %v900
        %v935 = vpop.f32.mrb[0].mxu0
        %v936 = vadd.f32 0.0, %v935
        %v937 = vpop.f32.mrb[0].mxu0
        %v938 = vpop.f32.mrb[0].mxu0
        %v939 = vpop.f32.mrb[0].mxu0
        %940 = vdwg.mxu0
        %s941 = scalar_lea.vmem [#allocation8], 64
        %v942 = vld [vmem:[%s941] sm:$0xf]
        %v943 = vld [vmem:[%s941 + $0x4] sm:$0xf]
        %v944 = vld [vmem:[%s941 + $0x8] sm:$0xf]
        %v945 = vld [vmem:[%s941 + $0xc] sm:$0xf]
        %v946 = vld [vmem:[%s941 + $0x10] sm:$0xf]
        %v947 = vld [vmem:[%s941 + $0x14] sm:$0xf]
        %v948 = vld [vmem:[%s941 + $0x18] sm:$0xf]
        %v949 = vld [vmem:[%s941 + $0x1c] sm:$0xf]
        %v950 = vunpack.c.l.bf16 %v942
        %v951 = vunpack.c.l.bf16 %v943
        %v952 = vunpack.c.l.bf16 %v944
        %v953 = vunpack.c.l.bf16 %v945
        %v954 = vunpack.c.l.bf16 %v946
        %v955 = vunpack.c.l.bf16 %v947
        %v956 = vunpack.c.l.bf16 %v948
        %v957 = vunpack.c.l.bf16 %v949
        %s958 = scalar_lea.vmem [#allocation8], 96
        %v959 = vld [vmem:[%s958] sm:$0xf]
        %v960 = vld [vmem:[%s958 + $0x4] sm:$0xf]
        %v961 = vld [vmem:[%s958 + $0x8] sm:$0xf]
        %v962 = vld [vmem:[%s958 + $0xc] sm:$0xf]
        %v963 = vld [vmem:[%s958 + $0x10] sm:$0xf]
        %v964 = vld [vmem:[%s958 + $0x14] sm:$0xf]
        %v965 = vld [vmem:[%s958 + $0x18] sm:$0xf]
        %v966 = vld [vmem:[%s958 + $0x1c] sm:$0xf]
        %v967 = vunpack.c.l.bf16 %v959
        %v968 = vunpack.c.l.bf16 %v960
        %v969 = vunpack.c.l.bf16 %v961
        %v970 = vunpack.c.l.bf16 %v962
        %v971 = vunpack.c.l.bf16 %v963
        %v972 = vunpack.c.l.bf16 %v964
        %v973 = vunpack.c.l.bf16 %v965
        %v974 = vunpack.c.l.bf16 %v966
        %v976 = vcombine.high %v936, %v936
        %v978 = vunpack.c.l.s4 1966171168
        %v979 = vunpack.c.0.s8 %v978
        %v980 = vlaneseq
        %v981 = vshrl.u32 %v980, 7
        %v982 = vsub.s32 %v979, %v981
        %v983 = vrot.slane %v936, %v982
        %v985 = vunpack.c.l.s4 1966171168
        %v986 = vunpack.c.0.s8 %v985
        %v987 = vlaneseq
        %v988 = vshrl.u32 %v987, 7
        %v989 = vsub.s32 %v986, %v988
        %v990 = vrot.slane %v976, %v989
        %v991 = vcombine.high %v983, %v983
        %v992 = vcombine.high %v990, %v990
        %v994 = vunpack.c.l.s4 1966171168
        %v995 = vunpack.c.0.s8 %v994
        %v996 = vlaneseq
        %v997 = vshrl.u32 %v996, 7
        %v998 = vsub.s32 %v995, %v997
        %v999 = vrot.slane %v983, %v998
        %v1001 = vunpack.c.l.s4 1966171168
        %v1002 = vunpack.c.0.s8 %v1001
        %v1003 = vlaneseq
        %v1004 = vshrl.u32 %v1003, 7
        %v1005 = vsub.s32 %v1002, %v1004
        %v1006 = vrot.slane %v990, %v1005
        %v1008 = vunpack.c.l.s4 1966171168
        %v1009 = vunpack.c.0.s8 %v1008
        %v1010 = vlaneseq
        %v1011 = vshrl.u32 %v1010, 7
        %v1012 = vsub.s32 %v1009, %v1011
        %v1013 = vrot.slane %v991, %v1012
        %v1015 = vunpack.c.l.s4 1966171168
        %v1016 = vunpack.c.0.s8 %v1015
        %v1017 = vlaneseq
        %v1018 = vshrl.u32 %v1017, 7
        %v1019 = vsub.s32 %v1016, %v1018
        %v1020 = vrot.slane %v992, %v1019
        %v1021 = vcombine.high %v999, %v999
        %v1022 = vcombine.high %v1006, %v1006
        %v1023 = vcombine.high %v1013, %v1013
        %v1024 = vcombine.high %v1020, %v1020
        %v1025 = vlaneseq
        %v1026 = vshrl.u32 %v1025, 7
        %v1027 = vsub.s32 0, %v1026
        %v1028 = vrot.slane %v999, %v1027
        %v1029 = vlaneseq
        %v1030 = vshrl.u32 %v1029, 7
        %v1031 = vsub.s32 0, %v1030
        %v1032 = vrot.slane %v1013, %v1031
        %v1033 = vlaneseq
        %v1034 = vshrl.u32 %v1033, 7
        %v1035 = vsub.s32 0, %v1034
        %v1036 = vrot.slane %v1021, %v1035
        %v1037 = vlaneseq
        %v1038 = vshrl.u32 %v1037, 7
        %v1039 = vsub.s32 0, %v1038
        %v1040 = vrot.slane %v1023, %v1039
        %v1041 = vlaneseq
        %v1042 = vshrl.u32 %v1041, 7
        %v1043 = vsub.s32 0, %v1042
        %v1044 = vrot.slane %v1006, %v1043
        %v1045 = vlaneseq
        %v1046 = vshrl.u32 %v1045, 7
        %v1047 = vsub.s32 0, %v1046
        %v1048 = vrot.slane %v1020, %v1047
        %v1049 = vlaneseq
        %v1050 = vshrl.u32 %v1049, 7
        %v1051 = vsub.s32 0, %v1050
        %v1052 = vrot.slane %v1022, %v1051
        %v1053 = vlaneseq
        %v1054 = vshrl.u32 %v1053, 7
        %v1055 = vsub.s32 0, %v1054
        %v1056 = vrot.slane %v1024, %v1055
        %v1065 = vmul.f32 %v1028, %v950
        %v1066 = vmul.f32 %v1032, %v951
        %v1067 = vmul.f32 %v1036, %v952
        %v1068 = vmul.f32 %v1040, %v953
        %v1069 = vmul.f32 %v1044, %v954
        %v1070 = vmul.f32 %v1048, %v955
        %v1071 = vmul.f32 %v1052, %v956
        %v1072 = vmul.f32 %v1056, %v957
        %1081 = vrot.lane.b32.xlu0 %v967, 8
        %v1082 = vpop.permute.xlu0 %1081
        %1083 = vrot.lane.b32.xlu0 %v968, 8
        %v1084 = vpop.permute.xlu0 %1083
        %1085 = vrot.lane.b32.xlu0 %v969, 8
        %v1086 = vpop.permute.xlu0 %1085
        %1087 = vrot.lane.b32.xlu0 %v970, 8
        %v1088 = vpop.permute.xlu0 %1087
        %1089 = vrot.lane.b32.xlu0 %v971, 8
        %v1090 = vpop.permute.xlu0 %1089
        %1091 = vrot.lane.b32.xlu0 %v972, 8
        %v1092 = vpop.permute.xlu0 %1091
        %1093 = vrot.lane.b32.xlu0 %v973, 8
        %v1094 = vpop.permute.xlu0 %1093
        %1095 = vrot.lane.b32.xlu0 %v974, 8
        %v1096 = vpop.permute.xlu0 %1095
        %v1105 = vmul.f32 %v1028, %v1082
        %v1106 = vmul.f32 %v1032, %v1084
        %v1107 = vmul.f32 %v1036, %v1086
        %v1108 = vmul.f32 %v1040, %v1088
        %v1109 = vmul.f32 %v1044, %v1090
        %v1110 = vmul.f32 %v1048, %v1092
        %v1111 = vmul.f32 %v1052, %v1094
        %v1112 = vmul.f32 %v1056, %v1096
        %1121 = vrot.lane.b32.xlu0 %v1105, 120
        %v1122 = vpop.permute.xlu0 %1121
        %1123 = vrot.lane.b32.xlu0 %v1106, 120
        %v1124 = vpop.permute.xlu0 %1123
        %1125 = vrot.lane.b32.xlu0 %v1107, 120
        %v1126 = vpop.permute.xlu0 %1125
        %1127 = vrot.lane.b32.xlu0 %v1108, 120
        %v1128 = vpop.permute.xlu0 %1127
        %1129 = vrot.lane.b32.xlu0 %v1109, 120
        %v1130 = vpop.permute.xlu0 %1129
        %1131 = vrot.lane.b32.xlu0 %v1110, 120
        %v1132 = vpop.permute.xlu0 %1131
        %1133 = vrot.lane.b32.xlu0 %v1111, 120
        %v1134 = vpop.permute.xlu0 %1133
        %1135 = vrot.lane.b32.xlu0 %v1112, 120
        %v1136 = vpop.permute.xlu0 %1135
        %v1145 = vsub.f32 %v1065, %v1122
        %v1146 = vsub.f32 %v1066, %v1124
        %v1147 = vsub.f32 %v1067, %v1126
        %v1148 = vsub.f32 %v1068, %v1128
        %v1149 = vsub.f32 %v1069, %v1130
        %v1150 = vsub.f32 %v1070, %v1132
        %v1151 = vsub.f32 %v1071, %v1134
        %v1152 = vsub.f32 %v1072, %v1136
        %v1153 = vsel %vm658, %v1145, 0.0
        %v1154 = vsel %vm658, %v1146, 0.0
        %v1155 = vadd.f32 %v1153, %v1154
        %v1156 = vsel %vm658, %v1147, 0.0
        %v1157 = vadd.f32 %v1155, %v1156
        %v1158 = vsel %vm658, %v1148, 0.0
        %v1159 = vadd.f32 %v1157, %v1158
        %v1160 = vsel %vm658, %v1149, 0.0
        %v1161 = vadd.f32 %v1159, %v1160
        %v1162 = vsel %vm658, %v1150, 0.0
        %v1163 = vadd.f32 %v1161, %v1162
        %v1164 = vsel %vm658, %v1151, 0.0
        %v1165 = vadd.f32 %v1163, %v1164
        %v1166 = vsel %vm658, %v1152, 0.0
        %v1167 = vadd.f32 %v1165, %v1166
        %v1168 = vmul.f32 %v1028, %v967
        %v1169 = vmul.f32 %v1032, %v968
        %v1170 = vmul.f32 %v1036, %v969
        %v1171 = vmul.f32 %v1040, %v970
        %v1172 = vmul.f32 %v1044, %v971
        %v1173 = vmul.f32 %v1048, %v972
        %v1174 = vmul.f32 %v1052, %v973
        %v1175 = vmul.f32 %v1056, %v974
        %1184 = vrot.lane.b32.xlu0 %v950, 8
        %v1185 = vpop.permute.xlu0 %1184
        %1186 = vrot.lane.b32.xlu0 %v951, 8
        %v1187 = vpop.permute.xlu0 %1186
        %1188 = vrot.lane.b32.xlu0 %v952, 8
        %v1189 = vpop.permute.xlu0 %1188
        %1190 = vrot.lane.b32.xlu0 %v953, 8
        %v1191 = vpop.permute.xlu0 %1190
        %1192 = vrot.lane.b32.xlu0 %v954, 8
        %v1193 = vpop.permute.xlu0 %1192
        %1194 = vrot.lane.b32.xlu0 %v955, 8
        %v1195 = vpop.permute.xlu0 %1194
        %1196 = vrot.lane.b32.xlu0 %v956, 8
        %v1197 = vpop.permute.xlu0 %1196
        %1198 = vrot.lane.b32.xlu0 %v957, 8
        %v1199 = vpop.permute.xlu0 %1198
        %v1208 = vmul.f32 %v1028, %v1185
        %v1209 = vmul.f32 %v1032, %v1187
        %v1210 = vmul.f32 %v1036, %v1189
        %v1211 = vmul.f32 %v1040, %v1191
        %v1212 = vmul.f32 %v1044, %v1193
        %v1213 = vmul.f32 %v1048, %v1195
        %v1214 = vmul.f32 %v1052, %v1197
        %v1215 = vmul.f32 %v1056, %v1199
        %1224 = vrot.lane.b32.xlu0 %v1208, 120
        %v1225 = vpop.permute.xlu0 %1224
        %1226 = vrot.lane.b32.xlu0 %v1209, 120
        %v1227 = vpop.permute.xlu0 %1226
        %1228 = vrot.lane.b32.xlu0 %v1210, 120
        %v1229 = vpop.permute.xlu0 %1228
        %1230 = vrot.lane.b32.xlu0 %v1211, 120
        %v1231 = vpop.permute.xlu0 %1230
        %1232 = vrot.lane.b32.xlu0 %v1212, 120
        %v1233 = vpop.permute.xlu0 %1232
        %1234 = vrot.lane.b32.xlu0 %v1213, 120
        %v1235 = vpop.permute.xlu0 %1234
        %1236 = vrot.lane.b32.xlu0 %v1214, 120
        %v1237 = vpop.permute.xlu0 %1236
        %1238 = vrot.lane.b32.xlu0 %v1215, 120
        %v1239 = vpop.permute.xlu0 %1238
        %v1248 = vadd.f32 %v1168, %v1225
        %v1249 = vadd.f32 %v1169, %v1227
        %v1250 = vadd.f32 %v1170, %v1229
        %v1251 = vadd.f32 %v1171, %v1231
        %v1252 = vadd.f32 %v1172, %v1233
        %v1253 = vadd.f32 %v1173, %v1235
        %v1254 = vadd.f32 %v1174, %v1237
        %v1255 = vadd.f32 %v1175, %v1239
        %v1256 = vsel %vm658, %v1248, 0.0
        %v1257 = vsel %vm658, %v1249, 0.0
        %v1258 = vadd.f32 %v1256, %v1257
        %v1259 = vsel %vm658, %v1250, 0.0
        %v1260 = vadd.f32 %v1258, %v1259
        %v1261 = vsel %vm658, %v1251, 0.0
        %v1262 = vadd.f32 %v1260, %v1261
        %v1263 = vsel %vm658, %v1252, 0.0
        %v1264 = vadd.f32 %v1262, %v1263
        %v1265 = vsel %vm658, %v1253, 0.0
        %v1266 = vadd.f32 %v1264, %v1265
        %v1267 = vsel %vm658, %v1254, 0.0
        %v1268 = vadd.f32 %v1266, %v1267
        %v1269 = vsel %vm658, %v1255, 0.0
        %v1270 = vadd.f32 %v1268, %v1269
        %1272 = vrot.lane.b32.xlu0 %v1270, 8
        %v1273 = vpop.permute.xlu0 %1272
        %v1275 = vsel %vm658, %v1167, %v1273
        %v1276 = vpack.c.bf16 %v1275, %v1275
        %v1278 = vsel %vm791, %v1276, 0
        %1280 = vmatprep.subr.bf16.mxu0 0
        %1281 = vmatpush1.bf16.msra.mxu0 %v789
        %1282 = vmatprep.subr.bf16.mxu0 0
        %1283 = vmatpush1.bf16.msra.mxu0 0
        %1284 = vmatprep.subr.bf16.mxu0 0
        %1285 = vmatpush1.bf16.msra.mxu0 0
        %1286 = vmatprep.subr.bf16.mxu0 0
        %1287 = vmatpush1.bf16.msra.mxu0 0
        %1288 = vmatprep.subr.bf16.mxu0 0
        %1289 = vmatpush1.bf16.msra.mxu0 0
        %1290 = vmatprep.subr.bf16.mxu0 0
        %1291 = vmatpush1.bf16.msra.mxu0 0
        %1292 = vmatprep.subr.bf16.mxu0 0
        %1293 = vmatpush1.bf16.msra.mxu0 0
        %1294 = vmatprep.subr.bf16.mxu0 0
        %1295 = vmatpush1.bf16.msra.mxu0 0
        %1296 = vmatprep.subr.bf16.mxu0 0
        %1297 = vmatpush1.bf16.msra.mxu0 0
        %1298 = vmatprep.subr.bf16.mxu0 0
        %1299 = vmatpush1.bf16.msra.mxu0 0
        %1300 = vmatprep.subr.bf16.mxu0 0
        %1301 = vmatpush1.bf16.msra.mxu0 0
        %1302 = vmatprep.subr.bf16.mxu0 0
        %1303 = vmatpush1.bf16.msra.mxu0 0
        %1304 = vmatprep.subr.bf16.mxu0 0
        %1305 = vmatpush1.bf16.msra.mxu0 0
        %1306 = vmatprep.subr.bf16.mxu0 0
        %1307 = vmatpush1.bf16.msra.mxu0 0
        %1308 = vmatprep.subr.bf16.mxu0 0
        %1309 = vmatpush1.bf16.msra.mxu0 0
        %1310 = vmatprep.subr.bf16.mxu0 0
        %1311 = vmatpush1.bf16.msra.mxu0 0
        %1312 = vmatprep.mubr.bf16.mxu0 0
        %1313 = vmatmul.mubr.bf16.gmra.mrb[0].mxu0 %v1278
        %v1314 = vpop.f32.mrb[0].mxu0
        %v1315 = vadd.f32 0.0, %v1314
        %v1316 = vpop.f32.mrb[0].mxu0
        %v1317 = vpop.f32.mrb[0].mxu0
        %v1318 = vpop.f32.mrb[0].mxu0
        %1319 = vdwg.mxu0
        %s1320 = scalar_lea.vmem [#allocation10], 4
        %v1321 = vld [vmem:[%s1320] sm:$0xf]
        %v1323 = vsel %vm658, %v1321, 0
        %v1326 = vsel %vm839, %v900, 0
        %1328 = vmatprep.subr.bf16.mxu0 0
        %1329 = vmatpush1.bf16.msra.mxu0 %v1326
        %1330 = vmatprep.subr.bf16.mxu0 0
        %1331 = vmatpush1.bf16.msra.mxu0 0
        %1332 = vmatprep.subr.bf16.mxu0 0
        %1333 = vmatpush1.bf16.msra.mxu0 0
        %1334 = vmatprep.subr.bf16.mxu0 0
        %1335 = vmatpush1.bf16.msra.mxu0 0
        %1336 = vmatprep.subr.bf16.mxu0 0
        %1337 = vmatpush1.bf16.msra.mxu0 0
        %1338 = vmatprep.subr.bf16.mxu0 0
        %1339 = vmatpush1.bf16.msra.mxu0 0
        %1340 = vmatprep.subr.bf16.mxu0 0
        %1341 = vmatpush1.bf16.msra.mxu0 0
        %1342 = vmatprep.subr.bf16.mxu0 0
        %1343 = vmatpush1.bf16.msra.mxu0 0
        %1344 = vmatprep.subr.bf16.mxu0 0
        %1345 = vmatpush1.bf16.msra.mxu0 0
        %1346 = vmatprep.subr.bf16.mxu0 0
        %1347 = vmatpush1.bf16.msra.mxu0 0
        %1348 = vmatprep.subr.bf16.mxu0 0
        %1349 = vmatpush1.bf16.msra.mxu0 0
        %1350 = vmatprep.subr.bf16.mxu0 0
        %1351 = vmatpush1.bf16.msra.mxu0 0
        %1352 = vmatprep.subr.bf16.mxu0 0
        %1353 = vmatpush1.bf16.msra.mxu0 0
        %1354 = vmatprep.subr.bf16.mxu0 0
        %1355 = vmatpush1.bf16.msra.mxu0 0
        %1356 = vmatprep.subr.bf16.mxu0 0
        %1357 = vmatpush1.bf16.msra.mxu0 0
        %1358 = vmatprep.subr.bf16.mxu0 0
        %1359 = vmatpush1.bf16.msra.mxu0 0
        %1360 = vmatprep.mubr.bf16.mxu0 0
        %1361 = vmatmul.mubr.bf16.gmra.mrb[0].mxu0 %v1323
        %v1362 = vpop.f32.mrb[0].mxu0
        %v1363 = vadd.f32 0.0, %v1362
        %v1364 = vpop.f32.mrb[0].mxu0
        %v1365 = vpop.f32.mrb[0].mxu0
        %v1366 = vpop.f32.mrb[0].mxu0
        %1367 = vdwg.mxu0
        %v1368 = vadd.f32 %v1315, %v1363
        %s1369 = scalar_lea.vmem [#allocation11], 8
        %v1370 = vld [vmem:[%s1369] sm:$0xff]
        %1372 = vset.pattern.permute.xlu0 0
        %1373 = vperm.xlu0 %1372, %v1370
        %v1374 = vpop.permute.xlu0 %1373
        %v1376 = vadd.f32 %v1368, %v1374
        %v1377 = vmul.f32 %v1376, 0.5
        %v1378 = vmul.f32 %v1376, 0.044715
        %v1379 = vmul.f32 %v1378, %v1376
        %v1380 = vmul.f32 %v1379, %v1376
        %v1381 = vadd.f32 %v1376, %v1380
        %v1382 = vmul.f32 %v1381, 0.7978846
        %v1383 = vtanh.pop %v1382
        %v1384 = vadd.f32 %v1383, 1.0
        %v1385 = vmul.f32 %v1377, %v1384
        %1386 = vst [vmem:[%s339] sm:$0xff] %v1385
        %s1387 = sand.u32 %s165, 1
        %s1388 = scalar_lea.sflag [#allocation4], %s1387
        %s1389 = sand.u32 %s165, 1
        %s1390 = smul.addr %s1389, 8
        %s1391 = scalar_lea.vmem [#allocation13], %s1390
        // Predicated region
        $region69: #{tpu_custom_call.1} parent=43 // pred_check
          %p1392 = pneg %p175
        $region70: #{tpu_custom_call.1} parent=43 // pred_check_branch
          %1394 = sbr.rel (%p1392) target = $region72
        $region71: #{tpu_custom_call.1} parent=43 // pred_region
          %s1396 = ssub.s32 128, 128
          %1397 = vsyncadd %s1388, %s1396
          %s1398 = smul.addr %s26, 128
          %s1399 = scalar_lea.hbm %s6, %s1398
          %s1401 = sshll.u32 %s1391, 4
          %s1402 = int_to_ptr.vmem [resolvable:$true] %s1401
          %1404 = dma.vmem_to_hbm [thread:$0]  %s1402, 128, %s1399, %s1388
        $region72: #{tpu_custom_call.1} parent=43 // pred_fallthru
          _
      $region44: #{tpu_custom_call.1} parent=5 // pred_fallthru
        _
      %p1405 = scmp.le.s32.totalorder 2, %s21
      // Predicated region
      $region73: #{tpu_custom_call.1} parent=5 // pred_check
        %p1406 = pneg %p1405
      $region74: #{tpu_custom_call.1} parent=5 // pred_check_branch
        %1408 = sbr.rel (%p1406) target = $region76
      $region75: #{tpu_custom_call.1} parent=5 // pred_region
        %s1409 = ssub.s32 %s21, 2
        // Predicated region
        $region77: #{tpu_custom_call.1} parent=75 // pred_check
          %p1410 = pneg %p181
        $region78: #{tpu_custom_call.1} parent=75 // pred_check_branch
          %1412 = sbr.rel (%p1410) target = $region80
        $region79: #{tpu_custom_call.1} parent=75 // pred_region
          %s1413 = sand.u32 %s166, 1
          %s1414 = scalar_lea.sflag [#allocation4], %s1413
          %s1415 = sand.u32 %s166, 1
          %s1416 = smul.addr %s1415, 8
          %s1417 = scalar_lea.vmem [#allocation13], %s1416
          %1418 = dma.done %s1414, 128
        $region80: #{tpu_custom_call.1} parent=75 // pred_fallthru
          _
      $region76: #{tpu_custom_call.1} parent=5 // pred_fallthru
        _
    $region6: #{tpu_custom_call.1} parent=1 // loop_footer
      %s25 = sadd.s32 1, %s21
    $region7: #{tpu_custom_call.1} parent=1 // loop_footer_branch
      %20 = sbr.rel target = $region3
    $region8: #{tpu_custom_call.1} parent=1 // loop_exit
      _
    %1419 = vsyncpa [#allocation3], 1
    %s1420 = scalar_lea.sflag [#allocation3], 1
    %1421 = vsyncpa %s1420, 1
    %1422 = vsyncpa [#allocation6], 1
    %1423 = vsyncpa [#allocation9], 1
    %1424 = vsyncpa [#allocation12], 1
    %1425 = vsyncpa [#allocation4], 1
    %s1426 = scalar_lea.sflag [#allocation4], 1
    %1427 = vsyncpa %s1426, 1

</llo_original>
